<compile_context>
chip_gen: v6e
topology: v6e:2x2x1
jax: 0.10.0
libtpu: 0.0.40
codegen_flags: <defaults>
</compile_context>

<pallas_src>
import functools

import jax
import jax.numpy as jnp
from jax.experimental import pallas as pl
from jax.experimental.pallas import tpu as pltpu


# ----------------------------------------------------------------------------
# Tiling constants
# ----------------------------------------------------------------------------
LANE = 128
TILE_ROWS = 512          # pass-1 row tile; also the src-node padding alignment
TILE_SRC = 256           # pass-2 src tile (256-deep contraction fills v6e/v7x MXU)
TILE_DST = 256           # pass-2 dst tile (fewer steps, less z re-streaming)
Z_RESIDENT_MAX_BYTES = 16 << 20   # hold z fully VMEM-resident below this
                                  # (x2 double-buffer still fits v7x's 64 MiB)

assert TILE_ROWS % TILE_SRC == 0


# ----------------------------------------------------------------------------
# helpers
# ----------------------------------------------------------------------------
def _round_up(x, m):
    return (x + m - 1) // m * m


def _pad2(x, rows, cols):
    return jnp.pad(x, ((0, rows - x.shape[0]), (0, cols - x.shape[1])))


# ----------------------------------------------------------------------------
# Pass 1: merged 2-head projection  z = h @ W^T  + per-node logit terms
# ----------------------------------------------------------------------------
def _proj2_kernel(h_ref, wT_ref, a4_ref, z0_ref, z1_ref, e_ref, *, k_out):
    """h: (TR, kp_in) bf16; wT: (kp_in, 2*kp_out) bf16 (two heads concatenated);
    a4: (2*kp_out, 4) f32 block-diag logit matrix -> e columns [es0, ed0, es1, ed1].
    z0/z1 get a ones column written at lane k_out (softmax-denominator trick)."""
    kp = z0_ref.shape[1]
    zcat = jnp.dot(h_ref[...], wT_ref[...], preferred_element_type=jnp.float32)
    e_ref[...] = jnp.dot(zcat, a4_ref[...], preferred_element_type=jnp.float32)
    onehot = (jax.lax.broadcasted_iota(jnp.int32, (1, kp), 1) == k_out
              ).astype(jnp.float32)
    z0_ref[...] = (zcat[:, :kp] + onehot).astype(jnp.bfloat16)
    z1_ref[...] = (zcat[:, kp:] + onehot).astype(jnp.bfloat16)


def _project_pair(h, fc_w0, attn_w0, fc_w1, attn_w1, *, tile_rows=TILE_ROWS):
    n, k_in = h.shape
    k_out = fc_w0.shape[0]
    kp_in = _round_up(k_in, LANE)
    # +1 guarantees a spare zero lane for the ones/denominator column.
    # TODO(synk): if k_out is already a multiple of 128 this pads a full extra
    # lane group; fall back to an explicit l scratch in that case.
    kp_out = _round_up(k_out + 1, LANE)
    np_src = _round_up(n, tile_rows)

    h_p = _pad2(h, np_src, kp_in).astype(jnp.bfloat16)
    wT = jnp.concatenate(
        [_pad2(fc_w0.T.astype(jnp.float32), kp_in, kp_out),
         _pad2(fc_w1.T.astype(jnp.float32), kp_in, kp_out)],
        axis=1).astype(jnp.bfloat16)                              # (kp_in, 2*kp_out)

    def a2(attn_w):
        a_src = attn_w[0, :k_out]
        a_dst = attn_w[0, k_out:]
        return _pad2(jnp.stack([a_src, a_dst], axis=1).astype(jnp.float32),
                     kp_out, 2)

    a4 = jnp.zeros((2 * kp_out, 4), jnp.float32)
    a4 = a4.at[:kp_out, 0:2].set(a2(attn_w0)).at[kp_out:, 2:4].set(a2(attn_w1))

    z0, z1, elog = pl.pallas_call(
        functools.partial(_proj2_kernel, k_out=k_out),
        out_shape=(jax.ShapeDtypeStruct((np_src, kp_out), jnp.bfloat16),
                   jax.ShapeDtypeStruct((np_src, kp_out), jnp.bfloat16),
                   jax.ShapeDtypeStruct((np_src, 4), jnp.float32)),
        grid_spec=pltpu.PrefetchScalarGridSpec(
            num_scalar_prefetch=0,
            grid=(np_src // tile_rows,),
            in_specs=[pl.BlockSpec((tile_rows, kp_in), lambda i: (i, 0)),
                      pl.BlockSpec((kp_in, 2 * kp_out), lambda i: (0, 0)),
                      pl.BlockSpec((2 * kp_out, 4), lambda i: (0, 0))],
            out_specs=[pl.BlockSpec((tile_rows, kp_out), lambda i: (i, 0)),
                       pl.BlockSpec((tile_rows, kp_out), lambda i: (i, 0)),
                       pl.BlockSpec((tile_rows, 4), lambda i: (i, 0))]),
        compiler_params=pltpu.CompilerParams(dimension_semantics=("parallel",)),
    )(h_p, wT, a4)
    return z0, z1, elog, k_out, kp_out


# ----------------------------------------------------------------------------
# Pass 2: flash-style masked softmax + aggregation (optionally fused residual)
# ----------------------------------------------------------------------------
def _gat_agg_body(ed_ref, es_ref, adj_ref, z_ref, emb_ref, out_ref, m_sc, acc_sc,
                  *, tile_src, k_out, z_resident):
    j = pl.program_id(1)

    @pl.when(j == 0)
    def _():
        m_sc[...] = jnp.full_like(m_sc, -1e30)
        acc_sc[...] = jnp.zeros_like(acc_sc)

    if z_resident:
        s0 = pl.multiple_of(j * tile_src, tile_src)
        z_tile = z_ref[pl.ds(s0, tile_src), :]
    else:
        z_tile = z_ref[...]

    e = ed_ref[...] + es_ref[...]                                  # (TD, TS) f32
    mask = adj_ref[...] != 0
    # Mask BEFORE the max so the stabilizer matches the reference softmax.
    e_msk = jnp.where(mask, e, -1e30)

    m_prev = m_sc[...]
    m_new = jnp.maximum(m_prev, jnp.max(e_msk, axis=1, keepdims=True))
    corr = jnp.exp(m_prev - m_new)
    # where() zero-fills non-edges; rows with no incoming edges stay zero
    # (matches DGL's zero-fill for message-less destinations).
    p = jnp.where(mask, jnp.exp(e - m_new), 0.0)

    # z carries a ones column at lane k_out, so p @ z also accumulates the
    # softmax denominator in acc[:, k_out] (no separate l scratch / row-sum).
    acc_sc[...] = corr * acc_sc[...] + jnp.dot(
        p.astype(jnp.bfloat16), z_tile, preferred_element_type=jnp.float32)
    m_sc[...] = m_new

    @pl.when(j == pl.num_programs(1) - 1)
    def _():
        acc = acc_sc[...]
        l = acc[:, k_out:k_out + 1]
        inv = pl.reciprocal(jnp.maximum(l, 1e-30), approx=True)
        res = acc * inv
        if emb_ref is not None:
            # Fused fuse1: softmax over a single logit is identically 1, so the
            # learned gate is a provable no-op and the fusion is emb + conv.
            res = emb_ref[...] + res
        out_ref[...] = res


def _gat_agg_kernel(ed_ref, es_ref, adj_ref, z_ref, out_ref, m_sc, acc_sc, *,
                    tile_src, k_out, z_resident):
    _gat_agg_body(ed_ref, es_ref, adj_ref, z_ref, None, out_ref, m_sc, acc_sc,
                  tile_src=tile_src, k_out=k_out, z_resident=z_resident)


def _gat_agg_fused_kernel(ed_ref, es_ref, adj_ref, z_ref, emb_ref, out_ref, m_sc,
                          acc_sc, *, tile_src, k_out, z_resident):
    _gat_agg_body(ed_ref, es_ref, adj_ref, z_ref, emb_ref, out_ref, m_sc, acc_sc,
                  tile_src=tile_src, k_out=k_out, z_resident=z_resident)


def _gat_aggregate(z, es_row, ed_col, adj_prep, emb_pad, *, k_out,
                   tile_dst=TILE_DST, tile_src=TILE_SRC):
    np_dst, np_src = adj_prep.shape
    kp_out = z.shape[1]
    assert z.shape[0] == np_src and np_dst % tile_dst == 0 and np_src % tile_src == 0

    z_bytes = int(z.size) * 2                      # bf16
    z_resident = z_bytes <= Z_RESIDENT_MAX_BYTES
    fuse = emb_pad is not None

    in_specs = [
        pl.BlockSpec((tile_dst, 1), lambda i, j: (i, 0)),            # ed
        pl.BlockSpec((1, tile_src), lambda i, j: (0, j)),            # es
        pl.BlockSpec((tile_dst, tile_src), lambda i, j: (i, j)),     # adj (int8)
        (pl.BlockSpec((np_src, kp_out), lambda i, j: (0, 0)) if z_resident
         else pl.BlockSpec((tile_src, kp_out), lambda i, j: (j, 0))),  # z
    ]
    args = [ed_col, es_row, adj_prep, z]
    if fuse:
        in_specs.append(pl.BlockSpec((tile_dst, kp_out), lambda i, j: (i, 0)))
        args.append(emb_pad)
        kern = functools.partial(_gat_agg_fused_kernel, tile_src=tile_src,
                                 k_out=k_out, z_resident=z_resident)
    else:
        kern = functools.partial(_gat_agg_kernel, tile_src=tile_src,
                                 k_out=k_out, z_resident=z_resident)

    cp_kwargs = dict(dimension_semantics=("parallel", "arbitrary"))
    if z_resident:
        # 2x for double-buffering plus working set; capped to fit v7x's 64 MiB.
        cp_kwargs["vmem_limit_bytes"] = int(
            min(48 << 20, max(32 << 20, 2 * z_bytes + (8 << 20))))

    return pl.pallas_call(
        kern,
        out_shape=jax.ShapeDtypeStruct((np_dst, kp_out), jnp.float32),
        grid_spec=pltpu.PrefetchScalarGridSpec(
            num_scalar_prefetch=0,
            grid=(np_dst // tile_dst, np_src // tile_src),
            in_specs=in_specs,
            out_specs=pl.BlockSpec((tile_dst, kp_out), lambda i, j: (i, 0)),
            scratch_shapes=[pltpu.VMEM((tile_dst, 1), jnp.float32),
                            pltpu.VMEM((tile_dst, kp_out), jnp.float32)]),
        compiler_params=pltpu.CompilerParams(**cp_kwargs),
    )(*args)


# ----------------------------------------------------------------------------
# Exercise fusion: 2 gate logits, softmax, gated residual add (padded I/O)
# ----------------------------------------------------------------------------
def _fuse2_kernel(emb_ref, c0_ref, c1_ref, we_ref, wc0_ref, wc1_ref, b_ref, out_ref):
    emb = emb_ref[...]
    c0 = c0_ref[...]
    c1 = c1_ref[...]
    s = (jnp.dot(emb, we_ref[...], preferred_element_type=jnp.float32)
         + jnp.dot(c0, wc0_ref[...], preferred_element_type=jnp.float32)
         + jnp.dot(c1, wc1_ref[...], preferred_element_type=jnp.float32)
         + b_ref[...])                                             # (TR, 2)
    m = jnp.max(s, axis=1, keepdims=True)
    e = jnp.exp(s - m)
    gates = e * pl.reciprocal(jnp.sum(e, axis=1, keepdims=True), approx=True)
    out_ref[...] = emb + gates[:, 0:1] * c0 + gates[:, 1:2] * c1


def _fuse2(emb, c0_p, c1_p, attn0_w, attn0_b, attn1_w, attn1_b, *, k_out):
    np_e, kp = c0_p.shape
    emb_p = _pad2(emb.astype(jnp.float32), np_e, kp)

    w0e, w0c = attn0_w[0, :k_out], attn0_w[0, k_out:]
    w1e, w1c = attn1_w[0, :k_out], attn1_w[0, k_out:]
    zeros = jnp.zeros((k_out,), jnp.float32)
    we = _pad2(jnp.stack([w0e, w1e], axis=1).astype(jnp.float32), kp, 2)
    wc0 = _pad2(jnp.stack([w0c, zeros], axis=1).astype(jnp.float32), kp, 2)
    wc1 = _pad2(jnp.stack([zeros, w1c], axis=1).astype(jnp.float32), kp, 2)
    b = jnp.stack([attn0_b[0], attn1_b[0]]).reshape(1, 2).astype(jnp.float32)

    tile = TILE_DST                        # largest 2^k multiple of TILE_DST <= 1024
    while tile * 2 <= min(np_e, 1024) and np_e % (tile * 2) == 0:
        tile *= 2

    return pl.pallas_call(
        _fuse2_kernel,
        out_shape=jax.ShapeDtypeStruct((np_e, kp), jnp.float32),
        grid_spec=pltpu.PrefetchScalarGridSpec(
            num_scalar_prefetch=0,
            grid=(np_e // tile,),
            in_specs=[pl.BlockSpec((tile, kp), lambda i: (i, 0)),
                      pl.BlockSpec((tile, kp), lambda i: (i, 0)),
                      pl.BlockSpec((tile, kp), lambda i: (i, 0)),
                      pl.BlockSpec((kp, 2), lambda i: (0, 0)),
                      pl.BlockSpec((kp, 2), lambda i: (0, 0)),
                      pl.BlockSpec((kp, 2), lambda i: (0, 0)),
                      pl.BlockSpec((1, 2), lambda i: (0, 0))],
            out_specs=pl.BlockSpec((tile, kp), lambda i: (i, 0))),
        compiler_params=pltpu.CompilerParams(dimension_semantics=("parallel",)),
    )(emb_p, c0_p, c1_p, we, wc0, wc1, b)


# ----------------------------------------------------------------------------
# Graph preparation (once per static graph) + full forward
# ----------------------------------------------------------------------------
def prepare_graphs(graph_dict, student_num, exercise_num, knowledge_num):
    """Slice each dense adjacency down to the destination rows actually consumed
    by the module's slicing, cast to int8 and pad to the pass-2 tile grid.
    Graphs are static — call this ONCE, outside the per-step forward."""
    n_se = exercise_num + student_num
    n_ek = exercise_num + knowledge_num
    np_se = _round_up(n_se, TILE_ROWS)
    np_ek = _round_up(n_ek, TILE_ROWS)

    def prep(adj, dst_start, dst_count, np_src):
        np_dst = _round_up(dst_count, TILE_DST)
        sl = adj[dst_start:dst_start + dst_count, :].astype(jnp.int8)
        return _pad2(sl, np_dst, np_src)

    return {
        "s_from_e": prep(graph_dict["s_from_e"], 0, student_num, np_se),
        "e_from_s": prep(graph_dict["e_from_s"], student_num, exercise_num, np_se),
        "e_from_k": prep(graph_dict["e_from_k"], 0, exercise_num, np_ek),
        "k_from_e": prep(graph_dict["k_from_e"], exercise_num, knowledge_num, np_ek),
    }


def scd_graph_layer_forward(stu_emb, exer_emb, kn_emb, graphs, params):
    """Faithful port of SCD_GraphLayer.forward (including its slicing choices).
    `graphs` is the output of prepare_graphs()."""
    s_num, K = stu_emb.shape
    e_num = exer_emb.shape[0]
    k_num = kn_emb.shape[0]

    e_k_weight = jnp.concatenate([exer_emb, kn_emb], axis=0)
    s_e_weight = jnp.concatenate([exer_emb, stu_emb], axis=0)

    # Pass 1: one merged 2-head projection per shared h (halves the h HBM read).
    z_sfe, z_efs, elog_se, k_out, kp_out = _project_pair(
        s_e_weight, params["s_from_e_fc"], params["s_from_e_attn"],
        params["e_from_s_fc"], params["e_from_s_attn"])
    z_efk, z_kfe, elog_ek, _, _ = _project_pair(
        e_k_weight, params["e_from_k_fc"], params["e_from_k_attn"],
        params["k_from_e_fc"], params["k_from_e_attn"])

    def head(z, elog, c_src, c_dst, adj_prep, dst_start, dst_count, emb):
        np_dst = adj_prep.shape[0]
        es_row = elog[:, c_src].reshape(1, -1)                       # (1, np_src)
        ed = elog[dst_start:dst_start + dst_count, c_dst]
        ed_col = jnp.pad(ed, (0, np_dst - dst_count)).reshape(np_dst, 1)
        emb_p = (None if emb is None
                 else _pad2(emb.astype(jnp.float32), np_dst, kp_out))
        return _gat_aggregate(z, es_row, ed_col, adj_prep, emb_p, k_out=k_out)

    # student / knowledge: residual add (s_attn0/k_attn0 gates are softmax over a
    # single logit == 1, i.e. provable no-ops) fused into pass-2 finalize.
    ult_stu_p = head(z_sfe, elog_se, 0, 1, graphs["s_from_e"], 0, s_num, stu_emb)
    efs_p = head(z_efs, elog_se, 2, 3, graphs["e_from_s"], s_num, e_num, None)
    efk_p = head(z_efk, elog_ek, 0, 1, graphs["e_from_k"], 0, e_num, None)
    ult_kn_p = head(z_kfe, elog_ek, 2, 3, graphs["k_from_e"], e_num, k_num, kn_emb)

    ult_exer_p = _fuse2(exer_emb, efs_p, efk_p,
                        params["e_attn0_w"], params["e_attn0_b"],
                        params["e_attn1_w"], params["e_attn1_b"], k_out=k_out)

    # slice back to logical shapes exactly once
    return ult_stu_p[:s_num, :K], ult_exer_p[:e_num, :K], ult_kn_p[:k_num, :K]


# ----------------------------------------------------------------------------
# Pure-JAX f32 reference (for sanity check)
# ----------------------------------------------------------------------------
def _gat_ref(h, fc_w, attn_w, adj):
    z = h @ fc_w.T
    k = z.shape[1]
    a_src = attn_w[0, :k]
    a_dst = attn_w[0, k:]
    e = (z @ a_dst)[:, None] + (z @ a_src)[None, :]
    e = jnp.where(adj > 0, e, -1e30)
    m = jnp.max(e, axis=1, keepdims=True)
    p = jnp.where(adj > 0, jnp.exp(e - m), 0.0)
    alpha = p / jnp.maximum(p.sum(1, keepdims=True), 1e-30)
    return alpha @ z


def _forward_ref(stu_emb, exer_emb, kn_emb, g, p):
    s_num, e_num = stu_emb.shape[0], exer_emb.shape[0]
    e_k = jnp.concatenate([exer_emb, kn_emb], 0)
    s_e = jnp.concatenate([exer_emb, stu_emb], 0)
    sfe = _gat_ref(s_e, p["s_from_e_fc"], p["s_from_e_attn"], g["s_from_e"])
    efs = _gat_ref(s_e, p["e_from_s_fc"], p["e_from_s_attn"], g["e_from_s"])
    efk = _gat_ref(e_k, p["e_from_k_fc"], p["e_from_k_attn"], g["e_from_k"])
    kfe = _gat_ref(e_k, p["k_from_e_fc"], p["k_from_e_attn"], g["k_from_e"])

    s0 = jnp.concatenate([stu_emb, sfe[:s_num]], 1) @ p["s_attn0_w"].T + p["s_attn0_b"]
    sc = jax.nn.softmax(s0, axis=1)
    ult_stu = stu_emb + sc[:, 0:1] * sfe[:s_num]

    e0 = jnp.concatenate([exer_emb, efs[s_num:]], 1) @ p["e_attn0_w"].T + p["e_attn0_b"]
    e1 = jnp.concatenate([exer_emb, efk[:e_num]], 1) @ p["e_attn1_w"].T + p["e_attn1_b"]
    sc = jax.nn.softmax(jnp.concatenate([e0, e1], 1), axis=1)
    ult_exer = exer_emb + sc[:, 0:1] * efs[s_num:] + sc[:, 1:2] * efk[:e_num]

    k0 = jnp.concatenate([kn_emb, kfe[e_num:]], 1) @ p["k_attn0_w"].T + p["k_attn0_b"]
    sc = jax.nn.softmax(k0, axis=1)
    ult_kn = kn_emb + sc[:, 0:1] * kfe[e_num:]
    return ult_stu, ult_exer, ult_kn


# ----------------------------------------------------------------------------
# Main
# ----------------------------------------------------------------------------
if __name__ == "__main__":
    # Sizes chosen so pass 2 has multiple dst AND src tiles (exercises the online
    # softmax and dst-range restriction) with non-tile-multiple node counts.
    STUDENT_NUM = 300
    EXERCISE_NUM = 100
    KNOWLEDGE_NUM = 32          # also the feature dimension

    key = jax.random.PRNGKey(0)
    keys = jax.random.split(key, 24)
    ki = iter(keys)

    def uni(k, shape, scale=0.1):
        return jax.random.uniform(k, shape, jnp.float32, -scale, scale)

    K = KNOWLEDGE_NUM
    params = {
        # GraphLayer fc (out,in) and attn_fc (1, 2*out), both bias-free
        "s_from_e_fc":   uni(next(ki), (K, K)),
        "s_from_e_attn": uni(next(ki), (1, 2 * K)),
        "e_from_s_fc":   uni(next(ki), (K, K)),
        "e_from_s_attn": uni(next(ki), (1, 2 * K)),
        "e_from_k_fc":   uni(next(ki), (K, K)),
        "e_from_k_attn": uni(next(ki), (1, 2 * K)),
        "k_from_e_fc":   uni(next(ki), (K, K)),
        "k_from_e_attn": uni(next(ki), (1, 2 * K)),
        # fusion attention heads (Linear(2K -> 1, bias=True))
        "e_attn0_w": uni(next(ki), (1, 2 * K)), "e_attn0_b": uni(next(ki), (1,)),
        "e_attn1_w": uni(next(ki), (1, 2 * K)), "e_attn1_b": uni(next(ki), (1,)),
        "s_attn0_w": uni(next(ki), (1, 2 * K)), "s_attn0_b": uni(next(ki), (1,)),
        "k_attn0_w": uni(next(ki), (1, 2 * K)), "k_attn0_b": uni(next(ki), (1,)),
    }

    stu_emb = uni(next(ki), (STUDENT_NUM, K), 1.0)
    exer_emb = uni(next(ki), (EXERCISE_NUM, K), 1.0)
    kn_emb = uni(next(ki), (KNOWLEDGE_NUM, K), 1.0)

    def make_adj(k, n):
        a = jax.random.uniform(k, (n, n)) < 0.4
        a = jnp.logical_or(a, jnp.eye(n, dtype=bool))   # every dst has an edge
        return a.astype(jnp.int8)                       # int8 adjacency mask

    n_se = EXERCISE_NUM + STUDENT_NUM       # node count of s/e graphs
    n_ek = EXERCISE_NUM + KNOWLEDGE_NUM     # node count of e/k graphs
    graph_dict = {
        "s_from_e": make_adj(next(ki), n_se),
        "e_from_s": make_adj(next(ki), n_se),
        "e_from_k": make_adj(next(ki), n_ek),
        "k_from_e": make_adj(next(ki), n_ek),
    }

    # Graphs are static: prepare (slice + int8 cast + pad) once, not per forward.
    graphs = prepare_graphs(graph_dict, STUDENT_NUM, EXERCISE_NUM, KNOWLEDGE_NUM)

    ult_stu, ult_exer, ult_kn = scd_graph_layer_forward(
        stu_emb, exer_emb, kn_emb, graphs, params)
    jax.block_until_ready((ult_stu, ult_exer, ult_kn))

    # sanity check vs pure-JAX f32 reference (kernels use bf16 MXU operands and
    # approximate reciprocal, hence the slightly relaxed tolerance)
    r_stu, r_exer, r_kn = _forward_ref(stu_emb, exer_emb, kn_emb, graph_dict, params)
    assert jnp.allclose(ult_stu, r_stu, rtol=2e-2, atol=2e-2)
    assert jnp.allclose(ult_exer, r_exer, rtol=2e-2, atol=2e-2)
    assert jnp.allclose(ult_kn, r_kn, rtol=2e-2, atol=2e-2)

    print("KERNEL_OK")
</pallas_src>

<mosaic_0001>
module attributes {stable_mosaic.version = 11 : i64} {
  func.func @_proj2_kernel(%arg0: i32, %arg1: memref<512x128xbf16, #tpu.memory_space<vmem>>, %arg2: memref<128x256xbf16, #tpu.memory_space<vmem>>, %arg3: memref<256x4xf32, #tpu.memory_space<vmem>>, %arg4: memref<512x128xbf16, #tpu.memory_space<vmem>>, %arg5: memref<512x128xbf16, #tpu.memory_space<vmem>>, %arg6: memref<512x4xf32, #tpu.memory_space<vmem>>) attributes {dimension_semantics = [#tpu.dimension_semantics<parallel>], iteration_bounds = array<i64: 1>, scalar_prefetch = 0 : i64, scratch_operands = 0 : i64, tpu.core_type = #tpu.core_type<tc>, window_params = [{transform_indices = @transform_0, window_bounds = array<i64: 512, 128>}, {pipeline_mode = #tpu.pipeline_mode<synchronous>, transform_indices = @transform_1, window_bounds = array<i64: 128, 256>}, {pipeline_mode = #tpu.pipeline_mode<synchronous>, transform_indices = @transform_2, window_bounds = array<i64: 256, 4>}, {transform_indices = @transform_3, window_bounds = array<i64: 512, 128>}, {transform_indices = @transform_4, window_bounds = array<i64: 512, 128>}, {transform_indices = @transform_5, window_bounds = array<i64: 512, 4>}]} {
    %c0 = arith.constant 0 : index
    %c0_0 = arith.constant 0 : index
    %0 = vector.load %arg1[%c0, %c0_0] : memref<512x128xbf16, #tpu.memory_space<vmem>>, vector<512x128xbf16>
    %c0_1 = arith.constant 0 : index
    %c0_2 = arith.constant 0 : index
    %1 = vector.load %arg2[%c0_1, %c0_2] : memref<128x256xbf16, #tpu.memory_space<vmem>>, vector<128x256xbf16>
    %cst = arith.constant dense<0.000000e+00> : vector<512x256xf32>
    %2 = tpu.matmul %0, %1, %cst {dimension_numbers = #tpu.dot_dimension_numbers<[1], [0], [0], [1], [0, 0, 1, 1], [], []>} : vector<512x128xbf16>, vector<128x256xbf16>, vector<512x256xf32> -> vector<512x256xf32>
    %c0_3 = arith.constant 0 : index
    %c0_4 = arith.constant 0 : index
    %3 = vector.load %arg3[%c0_3, %c0_4] : memref<256x4xf32, #tpu.memory_space<vmem>>, vector<256x4xf32>
    %cst_5 = arith.constant dense<0.000000e+00> : vector<512x4xf32>
    %4 = tpu.matmul %2, %3, %cst_5 {dimension_numbers = #tpu.dot_dimension_numbers<[1], [0], [0], [1], [0, 0, 1, 1], [], []>} : vector<512x256xf32>, vector<256x4xf32>, vector<512x4xf32> -> vector<512x4xf32>
    %c0_6 = arith.constant 0 : index
    %c0_7 = arith.constant 0 : index
    %5 = vector.load %arg6[%c0_6, %c0_7] : memref<512x4xf32, #tpu.memory_space<vmem>>, vector<512x4xf32>
    tpu.vector_store %arg6[%c0_6, %c0_7], %4 {strides = array<i32>} : memref<512x4xf32, #tpu.memory_space<vmem>>, vector<512x4xf32>,
    %6 = tpu.iota {dimensions = array<i32: 1>} : vector<1x128xi32>
    %c32_i32 = arith.constant 32 : i32
    %7 = vector.broadcast %c32_i32 : i32 to vector<1x128xi32>
    %8 = arith.cmpi eq, %6, %7 : vector<1x128xi32>
    %9 = arith.extui %8 : vector<1x128xi1> to vector<1x128xi32>
    %10 = arith.sitofp %9 : vector<1x128xi32> to vector<1x128xf32>
    %11 = vector.extract_strided_slice %2 {offsets = [0, 0], sizes = [512, 128], strides = [1, 1]} : vector<512x256xf32> to vector<512x128xf32>
    %12 = vector.broadcast %10 : vector<1x128xf32> to vector<512x128xf32>
    %13 = arith.addf %11, %12 : vector<512x128xf32>
    %14 = arith.truncf %13 : vector<512x128xf32> to vector<512x128xbf16>
    %c0_8 = arith.constant 0 : index
    %c0_9 = arith.constant 0 : index
    %15 = vector.load %arg4[%c0_8, %c0_9] : memref<512x128xbf16, #tpu.memory_space<vmem>>, vector<512x128xbf16>
    tpu.vector_store %arg4[%c0_8, %c0_9], %14 {strides = array<i32>} : memref<512x128xbf16, #tpu.memory_space<vmem>>, vector<512x128xbf16>,
    %16 = vector.extract_strided_slice %2 {offsets = [0, 128], sizes = [512, 128], strides = [1, 1]} : vector<512x256xf32> to vector<512x128xf32>
    %17 = vector.broadcast %10 : vector<1x128xf32> to vector<512x128xf32>
    %18 = arith.addf %16, %17 : vector<512x128xf32>
    %19 = arith.truncf %18 : vector<512x128xf32> to vector<512x128xbf16>
    %c0_10 = arith.constant 0 : index
    %c0_11 = arith.constant 0 : index
    %20 = vector.load %arg5[%c0_10, %c0_11] : memref<512x128xbf16, #tpu.memory_space<vmem>>, vector<512x128xbf16>
    tpu.vector_store %arg5[%c0_10, %c0_11], %19 {strides = array<i32>} : memref<512x128xbf16, #tpu.memory_space<vmem>>, vector<512x128xbf16>,
    return
  }
  func.func @transform_0(%arg0: i32) -> (i32, i32) {
    %c0_i32 = arith.constant 0 : i32
    %c0_i32_0 = arith.constant 0 : i32
    return %arg0, %c0_i32 : i32, i32
  }
  func.func @transform_1(%arg0: i32) -> (i32, i32) {
    %c0_i32 = arith.constant 0 : i32
    %c0_i32_0 = arith.constant 0 : i32
    %c0_i32_1 = arith.constant 0 : i32
    return %c0_i32, %c0_i32_0 : i32, i32
  }
  func.func @transform_2(%arg0: i32) -> (i32, i32) {
    %c0_i32 = arith.constant 0 : i32
    %c0_i32_0 = arith.constant 0 : i32
    %c0_i32_1 = arith.constant 0 : i32
    return %c0_i32, %c0_i32_0 : i32, i32
  }
  func.func @transform_3(%arg0: i32) -> (i32, i32) {
    %c0_i32 = arith.constant 0 : i32
    %c0_i32_0 = arith.constant 0 : i32
    return %arg0, %c0_i32 : i32, i32
  }
  func.func @transform_4(%arg0: i32) -> (i32, i32) {
    %c0_i32 = arith.constant 0 : i32
    %c0_i32_0 = arith.constant 0 : i32
    return %arg0, %c0_i32 : i32, i32
  }
  func.func @transform_5(%arg0: i32) -> (i32, i32) {
    %c0_i32 = arith.constant 0 : i32
    %c0_i32_0 = arith.constant 0 : i32
    return %arg0, %c0_i32 : i32, i32
  }
}

</mosaic_0001>

<llo_original>
// kernel: tpu_custom_call.1
$region0: #{tpu_custom_call.1}
  #allocation0 [shape = 'u32[]', space=smem, size = 0x4, offset = 0x4, fixed_abs, tag = 'smem constant byte address 0x4 - core index']
  #allocation1 [shape = 'u32[144,128]{1,0:T(1,128)}', space=vmem, size = 0x12000, scoped, tag = 'internal scratch']
  %s0 = inlined_call_operand.vmem [shape: bf16[512,128], index: 0, kind: input, shape index: {}]
  %s1 = inlined_call_operand.hbm [shape: bf16[128,256], index: 1, kind: input, shape index: {}]
  %s2 = inlined_call_operand.vmem [shape: f32[256,4], index: 2, kind: input, shape index: {}]
  %s3 = inlined_call_operand.hbm [shape: bf16[512,128], index: 3, kind: output, shape index: {0}]
  %s4 = inlined_call_operand.hbm [shape: bf16[512,128], index: 4, kind: output, shape index: {1}]
  %s5 = inlined_call_operand.vmem [shape: f32[512,4], index: 5, kind: output, shape index: {2}]
  %6 = xla_tuple %s3, %s4, %s5
  %s7 = sld [smem:[#allocation0]]
  $region42: #{tpu_custom_call.1} parent=0
    _
  %s9 = ssub.s32 1, %s7
  %s10 = scalar_select 0, %s9, %s7
  $region1: #{tpu_custom_call.1} parent=0
    #allocation2 [shape = 'u8[65536]{0}', space=vmem, size = 0x10000, scoped, tag = 'input window, operand 1, single buffered']
    #allocation3 [shape = 's32[1]{0}', space=sflag, size = 0x4, scoped, tag = 'scoped memory for tpu_custom_call.1']
    #allocation4 [shape = 's32[1]{0}', space=sflag, size = 0x4, scoped, tag = 'scoped memory for tpu_custom_call.1']
    #allocation5 [shape = 'u8[131072]{0}', space=vmem, size = 0x20000, scoped, tag = 'output window, operand 0, single buffered']
    #allocation6 [shape = 'u8[131072]{0}', space=vmem, size = 0x20000, scoped, tag = 'output window, operand 1, single buffered']
    #allocation7 [shape = 's32[1]{0}', space=sflag, size = 0x4, scoped, tag = 'scoped memory for tpu_custom_call.1']
    %11 = vsyncpa [#allocation3], 0
    %12 = vsyncpa [#allocation4], 0
    %13 = vsyncpa [#allocation7], 0
    // Predicated region
    $region2: #{tpu_custom_call.1} parent=1 // pred_check
      _
    $region3: #{tpu_custom_call.1} parent=1 // pred_check_branch
      %15 = sbr.rel (0) target = $region5
    $region4: #{tpu_custom_call.1} parent=1 // pred_region
      _
    $region5: #{tpu_custom_call.1} parent=1 // pred_fallthru
      _
    // Predicated region
    $region6: #{tpu_custom_call.1} parent=1 // pred_check
      _
    $region7: #{tpu_custom_call.1} parent=1 // pred_check_branch
      %17 = sbr.rel (0) target = $region9
    $region8: #{tpu_custom_call.1} parent=1 // pred_region
      %s19 = ssub.s32 2048, 2048
      %20 = vsyncadd [#allocation3], %s19
      %s21 = sshll.u32 [#allocation2], 4
      %s22 = int_to_ptr.vmem [resolvable:$true] %s21
      %27 = dma.hbm_to_vmem [thread:$0]  %s1, 2048, %s22, [#allocation3], 128, 128, 8
    $region9: #{tpu_custom_call.1} parent=1 // pred_fallthru
      _
    // Predicated region
    $region10: #{tpu_custom_call.1} parent=1 // pred_check
      _
    $region11: #{tpu_custom_call.1} parent=1 // pred_check_branch
      %29 = sbr.rel (0) target = $region13
    $region12: #{tpu_custom_call.1} parent=1 // pred_region
      _
    $region13: #{tpu_custom_call.1} parent=1 // pred_fallthru
      _
    // Predicated region
    $region14: #{tpu_custom_call.1} parent=1 // pred_check
      _
    $region15: #{tpu_custom_call.1} parent=1 // pred_check_branch
      %31 = sbr.rel (0) target = $region17
    $region16: #{tpu_custom_call.1} parent=1 // pred_region
      %32 = dma.done [#allocation3], 2048
    $region17: #{tpu_custom_call.1} parent=1 // pred_fallthru
      _
    %v34 = vld [vmem:[%s0] sm:$0xf]
    %v35 = vld [vmem:[%s0 + $0x4] sm:$0xf]
    %v36 = vld [vmem:[%s0 + $0x8] sm:$0xf]
    %v37 = vld [vmem:[%s0 + $0xc] sm:$0xf]
    %v38 = vld [vmem:[%s0 + $0x10] sm:$0xf]
    %v39 = vld [vmem:[%s0 + $0x14] sm:$0xf]
    %v40 = vld [vmem:[%s0 + $0x18] sm:$0xf]
    %v41 = vld [vmem:[%s0 + $0x1c] sm:$0xf]
    %v42 = vld [vmem:[%s0 + $0x20] sm:$0xf]
    %v43 = vld [vmem:[%s0 + $0x24] sm:$0xf]
    %v44 = vld [vmem:[%s0 + $0x28] sm:$0xf]
    %v45 = vld [vmem:[%s0 + $0x2c] sm:$0xf]
    %v46 = vld [vmem:[%s0 + $0x30] sm:$0xf]
    %v47 = vld [vmem:[%s0 + $0x34] sm:$0xf]
    %v48 = vld [vmem:[%s0 + $0x38] sm:$0xf]
    %v49 = vld [vmem:[%s0 + $0x3c] sm:$0xf]
    %v50 = vld [vmem:[%s0 + $0x40] sm:$0xf]
    %v51 = vld [vmem:[%s0 + $0x44] sm:$0xf]
    %v52 = vld [vmem:[%s0 + $0x48] sm:$0xf]
    %v53 = vld [vmem:[%s0 + $0x4c] sm:$0xf]
    %v54 = vld [vmem:[%s0 + $0x50] sm:$0xf]
    %v55 = vld [vmem:[%s0 + $0x54] sm:$0xf]
    %v56 = vld [vmem:[%s0 + $0x58] sm:$0xf]
    %v57 = vld [vmem:[%s0 + $0x5c] sm:$0xf]
    %v58 = vld [vmem:[%s0 + $0x60] sm:$0xf]
    %v59 = vld [vmem:[%s0 + $0x64] sm:$0xf]
    %v60 = vld [vmem:[%s0 + $0x68] sm:$0xf]
    %v61 = vld [vmem:[%s0 + $0x6c] sm:$0xf]
    %v62 = vld [vmem:[%s0 + $0x70] sm:$0xf]
    %v63 = vld [vmem:[%s0 + $0x74] sm:$0xf]
    %v64 = vld [vmem:[%s0 + $0x78] sm:$0xf]
    %v65 = vld [vmem:[%s0 + $0x7c] sm:$0xf]
    %v66 = vld [vmem:[%s0 + $0x80] sm:$0xf]
    %v67 = vld [vmem:[%s0 + $0x84] sm:$0xf]
    %v68 = vld [vmem:[%s0 + $0x88] sm:$0xf]
    %v69 = vld [vmem:[%s0 + $0x8c] sm:$0xf]
    %v70 = vld [vmem:[%s0 + $0x90] sm:$0xf]
    %v71 = vld [vmem:[%s0 + $0x94] sm:$0xf]
    %v72 = vld [vmem:[%s0 + $0x98] sm:$0xf]
    %v73 = vld [vmem:[%s0 + $0x9c] sm:$0xf]
    %v74 = vld [vmem:[%s0 + $0xa0] sm:$0xf]
    %v75 = vld [vmem:[%s0 + $0xa4] sm:$0xf]
    %v76 = vld [vmem:[%s0 + $0xa8] sm:$0xf]
    %v77 = vld [vmem:[%s0 + $0xac] sm:$0xf]
    %v78 = vld [vmem:[%s0 + $0xb0] sm:$0xf]
    %v79 = vld [vmem:[%s0 + $0xb4] sm:$0xf]
    %v80 = vld [vmem:[%s0 + $0xb8] sm:$0xf]
    %v81 = vld [vmem:[%s0 + $0xbc] sm:$0xf]
    %v82 = vld [vmem:[%s0 + $0xc0] sm:$0xf]
    %v83 = vld [vmem:[%s0 + $0xc4] sm:$0xf]
    %v84 = vld [vmem:[%s0 + $0xc8] sm:$0xf]
    %v85 = vld [vmem:[%s0 + $0xcc] sm:$0xf]
    %v86 = vld [vmem:[%s0 + $0xd0] sm:$0xf]
    %v87 = vld [vmem:[%s0 + $0xd4] sm:$0xf]
    %v88 = vld [vmem:[%s0 + $0xd8] sm:$0xf]
    %v89 = vld [vmem:[%s0 + $0xdc] sm:$0xf]
    %v90 = vld [vmem:[%s0 + $0xe0] sm:$0xf]
    %v91 = vld [vmem:[%s0 + $0xe4] sm:$0xf]
    %v92 = vld [vmem:[%s0 + $0xe8] sm:$0xf]
    %v93 = vld [vmem:[%s0 + $0xec] sm:$0xf]
    %v94 = vld [vmem:[%s0 + $0xf0] sm:$0xf]
    %v95 = vld [vmem:[%s0 + $0xf4] sm:$0xf]
    %v96 = vld [vmem:[%s0 + $0xf8] sm:$0xf]
    %v97 = vld [vmem:[%s0 + $0xfc] sm:$0xf]
    %v98 = vld [vmem:[#allocation2] sm:$0xff]
    %v99 = vld [vmem:[#allocation2 + $0x8] sm:$0xff]
    %v100 = vld [vmem:[#allocation2 + $0x10] sm:$0xff]
    %v101 = vld [vmem:[#allocation2 + $0x18] sm:$0xff]
    %v102 = vld [vmem:[#allocation2 + $0x20] sm:$0xff]
    %v103 = vld [vmem:[#allocation2 + $0x28] sm:$0xff]
    %v104 = vld [vmem:[#allocation2 + $0x30] sm:$0xff]
    %v105 = vld [vmem:[#allocation2 + $0x38] sm:$0xff]
    %v106 = vld [vmem:[#allocation2 + $0x40] sm:$0xff]
    %v107 = vld [vmem:[#allocation2 + $0x48] sm:$0xff]
    %v108 = vld [vmem:[#allocation2 + $0x50] sm:$0xff]
    %v109 = vld [vmem:[#allocation2 + $0x58] sm:$0xff]
    %v110 = vld [vmem:[#allocation2 + $0x60] sm:$0xff]
    %v111 = vld [vmem:[#allocation2 + $0x68] sm:$0xff]
    %v112 = vld [vmem:[#allocation2 + $0x70] sm:$0xff]
    %v113 = vld [vmem:[#allocation2 + $0x78] sm:$0xff]
    %v178 = vunpack.c.l.b16 %v34
    %v179 = vunpack.c.l.b16 %v35
    %v180 = vunpack.c.l.b16 %v36
    %v181 = vunpack.c.l.b16 %v37
    %v182 = vunpack.c.l.b16 %v38
    %v183 = vunpack.c.l.b16 %v39
    %v184 = vunpack.c.l.b16 %v40
    %v185 = vunpack.c.l.b16 %v41
    %v186 = vunpack.c.l.b16 %v42
    %v187 = vunpack.c.l.b16 %v43
    %v188 = vunpack.c.l.b16 %v44
    %v189 = vunpack.c.l.b16 %v45
    %v190 = vunpack.c.l.b16 %v46
    %v191 = vunpack.c.l.b16 %v47
    %v192 = vunpack.c.l.b16 %v48
    %v193 = vunpack.c.l.b16 %v49
    %v194 = vunpack.c.l.b16 %v50
    %v195 = vunpack.c.l.b16 %v51
    %v196 = vunpack.c.l.b16 %v52
    %v197 = vunpack.c.l.b16 %v53
    %v198 = vunpack.c.l.b16 %v54
    %v199 = vunpack.c.l.b16 %v55
    %v200 = vunpack.c.l.b16 %v56
    %v201 = vunpack.c.l.b16 %v57
    %v202 = vunpack.c.l.b16 %v58
    %v203 = vunpack.c.l.b16 %v59
    %v204 = vunpack.c.l.b16 %v60
    %v205 = vunpack.c.l.b16 %v61
    %v206 = vunpack.c.l.b16 %v62
    %v207 = vunpack.c.l.b16 %v63
    %v208 = vunpack.c.l.b16 %v64
    %v209 = vunpack.c.l.b16 %v65
    %v210 = vunpack.c.l.b16 %v66
    %v211 = vunpack.c.l.b16 %v67
    %v212 = vunpack.c.l.b16 %v68
    %v213 = vunpack.c.l.b16 %v69
    %v214 = vunpack.c.l.b16 %v70
    %v215 = vunpack.c.l.b16 %v71
    %v216 = vunpack.c.l.b16 %v72
    %v217 = vunpack.c.l.b16 %v73
    %v218 = vunpack.c.l.b16 %v74
    %v219 = vunpack.c.l.b16 %v75
    %v220 = vunpack.c.l.b16 %v76
    %v221 = vunpack.c.l.b16 %v77
    %v222 = vunpack.c.l.b16 %v78
    %v223 = vunpack.c.l.b16 %v79
    %v224 = vunpack.c.l.b16 %v80
    %v225 = vunpack.c.l.b16 %v81
    %v226 = vunpack.c.l.b16 %v82
    %v227 = vunpack.c.l.b16 %v83
    %v228 = vunpack.c.l.b16 %v84
    %v229 = vunpack.c.l.b16 %v85
    %v230 = vunpack.c.l.b16 %v86
    %v231 = vunpack.c.l.b16 %v87
    %v232 = vunpack.c.l.b16 %v88
    %v233 = vunpack.c.l.b16 %v89
    %v234 = vunpack.c.l.b16 %v90
    %v235 = vunpack.c.l.b16 %v91
    %v236 = vunpack.c.l.b16 %v92
    %v237 = vunpack.c.l.b16 %v93
    %v238 = vunpack.c.l.b16 %v94
    %v239 = vunpack.c.l.b16 %v95
    %v240 = vunpack.c.l.b16 %v96
    %v241 = vunpack.c.l.b16 %v97
    %v242 = vpack.c.b16 %v179, %v178
    %v243 = vpack.c.b16 %v181, %v180
    %v244 = vpack.c.b16 %v183, %v182
    %v245 = vpack.c.b16 %v185, %v184
    %v246 = vpack.c.b16 %v187, %v186
    %v247 = vpack.c.b16 %v189, %v188
    %v248 = vpack.c.b16 %v191, %v190
    %v249 = vpack.c.b16 %v193, %v192
    %v250 = vpack.c.b16 %v195, %v194
    %v251 = vpack.c.b16 %v197, %v196
    %v252 = vpack.c.b16 %v199, %v198
    %v253 = vpack.c.b16 %v201, %v200
    %v254 = vpack.c.b16 %v203, %v202
    %v255 = vpack.c.b16 %v205, %v204
    %v256 = vpack.c.b16 %v207, %v206
    %v257 = vpack.c.b16 %v209, %v208
    %v258 = vpack.c.b16 %v211, %v210
    %v259 = vpack.c.b16 %v213, %v212
    %v260 = vpack.c.b16 %v215, %v214
    %v261 = vpack.c.b16 %v217, %v216
    %v262 = vpack.c.b16 %v219, %v218
    %v263 = vpack.c.b16 %v221, %v220
    %v264 = vpack.c.b16 %v223, %v222
    %v265 = vpack.c.b16 %v225, %v224
    %v266 = vpack.c.b16 %v227, %v226
    %v267 = vpack.c.b16 %v229, %v228
    %v268 = vpack.c.b16 %v231, %v230
    %v269 = vpack.c.b16 %v233, %v232
    %v270 = vpack.c.b16 %v235, %v234
    %v271 = vpack.c.b16 %v237, %v236
    %v272 = vpack.c.b16 %v239, %v238
    %v273 = vpack.c.b16 %v241, %v240
    %v322 = vunpack.c.l.b16 %v98
    %v323 = vunpack.c.h.b16 %v98
    %v324 = vunpack.c.l.b16 %v99
    %v325 = vunpack.c.h.b16 %v99
    %v326 = vunpack.c.l.b16 %v100
    %v327 = vunpack.c.h.b16 %v100
    %v328 = vunpack.c.l.b16 %v101
    %v329 = vunpack.c.h.b16 %v101
    %v330 = vunpack.c.l.b16 %v102
    %v331 = vunpack.c.h.b16 %v102
    %v332 = vunpack.c.l.b16 %v103
    %v333 = vunpack.c.h.b16 %v103
    %v334 = vunpack.c.l.b16 %v104
    %v335 = vunpack.c.h.b16 %v104
    %v336 = vunpack.c.l.b16 %v105
    %v337 = vunpack.c.h.b16 %v105
    %v338 = vunpack.c.l.b16 %v106
    %v339 = vunpack.c.h.b16 %v106
    %v340 = vunpack.c.l.b16 %v107
    %v341 = vunpack.c.h.b16 %v107
    %v342 = vunpack.c.l.b16 %v108
    %v343 = vunpack.c.h.b16 %v108
    %v344 = vunpack.c.l.b16 %v109
    %v345 = vunpack.c.h.b16 %v109
    %v346 = vunpack.c.l.b16 %v110
    %v347 = vunpack.c.h.b16 %v110
    %v348 = vunpack.c.l.b16 %v111
    %v349 = vunpack.c.h.b16 %v111
    %v350 = vunpack.c.l.b16 %v112
    %v351 = vunpack.c.h.b16 %v112
    %v352 = vunpack.c.l.b16 %v113
    %v353 = vunpack.c.h.b16 %v113
    %v354 = vpack.c.b16 %v324, %v322
    %v355 = vpack.c.b16 %v325, %v323
    %v356 = vpack.c.b16 %v328, %v326
    %v357 = vpack.c.b16 %v329, %v327
    %v358 = vpack.c.b16 %v332, %v330
    %v359 = vpack.c.b16 %v333, %v331
    %v360 = vpack.c.b16 %v336, %v334
    %v361 = vpack.c.b16 %v337, %v335
    %v362 = vpack.c.b16 %v340, %v338
    %v363 = vpack.c.b16 %v341, %v339
    %v364 = vpack.c.b16 %v344, %v342
    %v365 = vpack.c.b16 %v345, %v343
    %v366 = vpack.c.b16 %v348, %v346
    %v367 = vpack.c.b16 %v349, %v347
    %v368 = vpack.c.b16 %v352, %v350
    %v369 = vpack.c.b16 %v353, %v351
    %386 = vmatprep.subr.bf16.mxu0 %v369
    %387 = vmatpush1.bf16.msra.mxu0 %v368
    %388 = vmatprep.subr.bf16.mxu0 %v367
    %389 = vmatpush1.bf16.msra.mxu0 %v366
    %390 = vmatprep.subr.bf16.mxu0 %v365
    %391 = vmatpush1.bf16.msra.mxu0 %v364
    %392 = vmatprep.subr.bf16.mxu0 %v363
    %393 = vmatpush1.bf16.msra.mxu0 %v362
    %394 = vmatprep.subr.bf16.mxu0 %v361
    %395 = vmatpush1.bf16.msra.mxu0 %v360
    %396 = vmatprep.subr.bf16.mxu0 %v359
    %397 = vmatpush1.bf16.msra.mxu0 %v358
    %398 = vmatprep.subr.bf16.mxu0 %v357
    %399 = vmatpush1.bf16.msra.mxu0 %v356
    %400 = vmatprep.subr.bf16.mxu0 %v355
    %401 = vmatpush1.bf16.msra.mxu0 %v354
    %402 = vmatprep.subr.bf16.mxu0 0
    %403 = vmatpush2.bf16.msra.mxu0 0
    %404 = vmatprep.subr.bf16.mxu0 0
    %405 = vmatpush2.bf16.msra.mxu0 0
    %406 = vmatprep.subr.bf16.mxu0 0
    %407 = vmatpush2.bf16.msra.mxu0 0
    %408 = vmatprep.subr.bf16.mxu0 0
    %409 = vmatpush2.bf16.msra.mxu0 0
    %410 = vmatprep.subr.bf16.mxu0 0
    %411 = vmatpush2.bf16.msra.mxu0 0
    %412 = vmatprep.subr.bf16.mxu0 0
    %413 = vmatpush2.bf16.msra.mxu0 0
    %414 = vmatprep.subr.bf16.mxu0 0
    %415 = vmatpush2.bf16.msra.mxu0 0
    %416 = vmatprep.subr.bf16.mxu0 0
    %417 = vmatpush2.bf16.msra.mxu0 0
    %418 = vmatprep.mubr.bf16.mxu0 0
    %419 = vmatmul.mubr.bf16.gmra.mxu0 %v242
    %v420 = vpop.f32.mrf.mxu0
    %v421 = vadd.f32 0.0, %v420
    %v422 = vpop.f32.mrf.mxu0
    %v423 = vadd.f32 0.0, %v422
    %v424 = vpop.f32.mrf.mxu0
    %v425 = vadd.f32 0.0, %v424
    %v426 = vpop.f32.mrf.mxu0
    %v427 = vadd.f32 0.0, %v426
    %428 = vmatprep.mubr.bf16.mxu0 0
    %429 = vmatmul.mubr.bf16.gmra.mxu0 %v243
    %v430 = vpop.f32.mrf.mxu0
    %v431 = vadd.f32 0.0, %v430
    %v432 = vpop.f32.mrf.mxu0
    %v433 = vadd.f32 0.0, %v432
    %v434 = vpop.f32.mrf.mxu0
    %v435 = vadd.f32 0.0, %v434
    %v436 = vpop.f32.mrf.mxu0
    %v437 = vadd.f32 0.0, %v436
    %438 = vmatprep.mubr.bf16.mxu0 0
    %439 = vmatmul.mubr.bf16.gmra.mxu0 %v244
    %v440 = vpop.f32.mrf.mxu0
    %v441 = vadd.f32 0.0, %v440
    %v442 = vpop.f32.mrf.mxu0
    %v443 = vadd.f32 0.0, %v442
    %v444 = vpop.f32.mrf.mxu0
    %v445 = vadd.f32 0.0, %v444
    %v446 = vpop.f32.mrf.mxu0
    %v447 = vadd.f32 0.0, %v446
    %448 = vmatprep.mubr.bf16.mxu0 0
    %449 = vmatmul.mubr.bf16.gmra.mxu0 %v245
    %v450 = vpop.f32.mrf.mxu0
    %v451 = vadd.f32 0.0, %v450
    %v452 = vpop.f32.mrf.mxu0
    %v453 = vadd.f32 0.0, %v452
    %v454 = vpop.f32.mrf.mxu0
    %v455 = vadd.f32 0.0, %v454
    %v456 = vpop.f32.mrf.mxu0
    %v457 = vadd.f32 0.0, %v456
    %458 = vmatprep.mubr.bf16.mxu0 0
    %459 = vmatmul.mubr.bf16.gmra.mxu0 %v246
    %v460 = vpop.f32.mrf.mxu0
    %v461 = vadd.f32 0.0, %v460
    %v462 = vpop.f32.mrf.mxu0
    %v463 = vadd.f32 0.0, %v462
    %v464 = vpop.f32.mrf.mxu0
    %v465 = vadd.f32 0.0, %v464
    %v466 = vpop.f32.mrf.mxu0
    %v467 = vadd.f32 0.0, %v466
    %468 = vmatprep.mubr.bf16.mxu0 0
    %469 = vmatmul.mubr.bf16.gmra.mxu0 %v247
    %v470 = vpop.f32.mrf.mxu0
    %v471 = vadd.f32 0.0, %v470
    %v472 = vpop.f32.mrf.mxu0
    %v473 = vadd.f32 0.0, %v472
    %v474 = vpop.f32.mrf.mxu0
    %v475 = vadd.f32 0.0, %v474
    %v476 = vpop.f32.mrf.mxu0
    %v477 = vadd.f32 0.0, %v476
    %478 = vmatprep.mubr.bf16.mxu0 0
    %479 = vmatmul.mubr.bf16.gmra.mxu0 %v248
    %v480 = vpop.f32.mrf.mxu0
    %v481 = vadd.f32 0.0, %v480
    %v482 = vpop.f32.mrf.mxu0
    %v483 = vadd.f32 0.0, %v482
    %v484 = vpop.f32.mrf.mxu0
    %v485 = vadd.f32 0.0, %v484
    %v486 = vpop.f32.mrf.mxu0
    %v487 = vadd.f32 0.0, %v486
    %488 = vmatprep.mubr.bf16.mxu0 0
    %489 = vmatmul.mubr.bf16.gmra.mxu0 %v249
    %v490 = vpop.f32.mrf.mxu0
    %v491 = vadd.f32 0.0, %v490
    %v492 = vpop.f32.mrf.mxu0
    %v493 = vadd.f32 0.0, %v492
    %v494 = vpop.f32.mrf.mxu0
    %v495 = vadd.f32 0.0, %v494
    %v496 = vpop.f32.mrf.mxu0
    %v497 = vadd.f32 0.0, %v496
    %498 = vmatprep.mubr.bf16.mxu0 0
    %499 = vmatmul.mubr.bf16.gmra.mxu0 %v250
    %v500 = vpop.f32.mrf.mxu0
    %v501 = vadd.f32 0.0, %v500
    %v502 = vpop.f32.mrf.mxu0
    %v503 = vadd.f32 0.0, %v502
    %v504 = vpop.f32.mrf.mxu0
    %v505 = vadd.f32 0.0, %v504
    %v506 = vpop.f32.mrf.mxu0
    %v507 = vadd.f32 0.0, %v506
    %508 = vmatprep.mubr.bf16.mxu0 0
    %509 = vmatmul.mubr.bf16.gmra.mxu0 %v251
    %v510 = vpop.f32.mrf.mxu0
    %v511 = vadd.f32 0.0, %v510
    %v512 = vpop.f32.mrf.mxu0
    %v513 = vadd.f32 0.0, %v512
    %v514 = vpop.f32.mrf.mxu0
    %v515 = vadd.f32 0.0, %v514
    %v516 = vpop.f32.mrf.mxu0
    %v517 = vadd.f32 0.0, %v516
    %518 = vmatprep.mubr.bf16.mxu0 0
    %519 = vmatmul.mubr.bf16.gmra.mxu0 %v252
    %v520 = vpop.f32.mrf.mxu0
    %v521 = vadd.f32 0.0, %v520
    %v522 = vpop.f32.mrf.mxu0
    %v523 = vadd.f32 0.0, %v522
    %v524 = vpop.f32.mrf.mxu0
    %v525 = vadd.f32 0.0, %v524
    %v526 = vpop.f32.mrf.mxu0
    %v527 = vadd.f32 0.0, %v526
    %528 = vmatprep.mubr.bf16.mxu0 0
    %529 = vmatmul.mubr.bf16.gmra.mxu0 %v253
    %v530 = vpop.f32.mrf.mxu0
    %v531 = vadd.f32 0.0, %v530
    %v532 = vpop.f32.mrf.mxu0
    %v533 = vadd.f32 0.0, %v532
    %v534 = vpop.f32.mrf.mxu0
    %v535 = vadd.f32 0.0, %v534
    %v536 = vpop.f32.mrf.mxu0
    %v537 = vadd.f32 0.0, %v536
    %538 = vmatprep.mubr.bf16.mxu0 0
    %539 = vmatmul.mubr.bf16.gmra.mxu0 %v254
    %v540 = vpop.f32.mrf.mxu0
    %v541 = vadd.f32 0.0, %v540
    %v542 = vpop.f32.mrf.mxu0
    %v543 = vadd.f32 0.0, %v542
    %v544 = vpop.f32.mrf.mxu0
    %v545 = vadd.f32 0.0, %v544
    %v546 = vpop.f32.mrf.mxu0
    %v547 = vadd.f32 0.0, %v546
    %548 = vmatprep.mubr.bf16.mxu0 0
    %549 = vmatmul.mubr.bf16.gmra.mxu0 %v255
    %v550 = vpop.f32.mrf.mxu0
    %v551 = vadd.f32 0.0, %v550
    %v552 = vpop.f32.mrf.mxu0
    %v553 = vadd.f32 0.0, %v552
    %v554 = vpop.f32.mrf.mxu0
    %v555 = vadd.f32 0.0, %v554
    %v556 = vpop.f32.mrf.mxu0
    %v557 = vadd.f32 0.0, %v556
    %558 = vmatprep.mubr.bf16.mxu0 0
    %559 = vmatmul.mubr.bf16.gmra.mxu0 %v256
    %v560 = vpop.f32.mrf.mxu0
    %v561 = vadd.f32 0.0, %v560
    %v562 = vpop.f32.mrf.mxu0
    %v563 = vadd.f32 0.0, %v562
    %v564 = vpop.f32.mrf.mxu0
    %v565 = vadd.f32 0.0, %v564
    %v566 = vpop.f32.mrf.mxu0
    %v567 = vadd.f32 0.0, %v566
    %568 = vmatprep.mubr.bf16.mxu0 0
    %569 = vmatmul.mubr.bf16.gmra.mxu0 %v257
    %v570 = vpop.f32.mrf.mxu0
    %v571 = vadd.f32 0.0, %v570
    %v572 = vpop.f32.mrf.mxu0
    %v573 = vadd.f32 0.0, %v572
    %v574 = vpop.f32.mrf.mxu0
    %v575 = vadd.f32 0.0, %v574
    %v576 = vpop.f32.mrf.mxu0
    %v577 = vadd.f32 0.0, %v576
    %578 = vmatprep.mubr.bf16.mxu0 0
    %579 = vmatmul.mubr.bf16.gmra.mxu0 %v258
    %v580 = vpop.f32.mrf.mxu0
    %v581 = vadd.f32 0.0, %v580
    %v582 = vpop.f32.mrf.mxu0
    %v583 = vadd.f32 0.0, %v582
    %v584 = vpop.f32.mrf.mxu0
    %v585 = vadd.f32 0.0, %v584
    %v586 = vpop.f32.mrf.mxu0
    %v587 = vadd.f32 0.0, %v586
    %588 = vmatprep.mubr.bf16.mxu0 0
    %589 = vmatmul.mubr.bf16.gmra.mxu0 %v259
    %v590 = vpop.f32.mrf.mxu0
    %v591 = vadd.f32 0.0, %v590
    %v592 = vpop.f32.mrf.mxu0
    %v593 = vadd.f32 0.0, %v592
    %v594 = vpop.f32.mrf.mxu0
    %v595 = vadd.f32 0.0, %v594
    %v596 = vpop.f32.mrf.mxu0
    %v597 = vadd.f32 0.0, %v596
    %598 = vmatprep.mubr.bf16.mxu0 0
    %599 = vmatmul.mubr.bf16.gmra.mxu0 %v260
    %v600 = vpop.f32.mrf.mxu0
    %v601 = vadd.f32 0.0, %v600
    %v602 = vpop.f32.mrf.mxu0
    %v603 = vadd.f32 0.0, %v602
    %v604 = vpop.f32.mrf.mxu0
    %v605 = vadd.f32 0.0, %v604
    %v606 = vpop.f32.mrf.mxu0
    %v607 = vadd.f32 0.0, %v606
    %608 = vmatprep.mubr.bf16.mxu0 0
    %609 = vmatmul.mubr.bf16.gmra.mxu0 %v261
    %v610 = vpop.f32.mrf.mxu0
    %v611 = vadd.f32 0.0, %v610
    %v612 = vpop.f32.mrf.mxu0
    %v613 = vadd.f32 0.0, %v612
    %v614 = vpop.f32.mrf.mxu0
    %v615 = vadd.f32 0.0, %v614
    %v616 = vpop.f32.mrf.mxu0
    %v617 = vadd.f32 0.0, %v616
    %618 = vmatprep.mubr.bf16.mxu0 0
    %619 = vmatmul.mubr.bf16.gmra.mxu0 %v262
    %v620 = vpop.f32.mrf.mxu0
    %v621 = vadd.f32 0.0, %v620
    %v622 = vpop.f32.mrf.mxu0
    %v623 = vadd.f32 0.0, %v622
    %v624 = vpop.f32.mrf.mxu0
    %v625 = vadd.f32 0.0, %v624
    %v626 = vpop.f32.mrf.mxu0
    %v627 = vadd.f32 0.0, %v626
    %628 = vmatprep.mubr.bf16.mxu0 0
    %629 = vmatmul.mubr.bf16.gmra.mxu0 %v263
    %v630 = vpop.f32.mrf.mxu0
    %v631 = vadd.f32 0.0, %v630
    %v632 = vpop.f32.mrf.mxu0
    %v633 = vadd.f32 0.0, %v632
    %v634 = vpop.f32.mrf.mxu0
    %v635 = vadd.f32 0.0, %v634
    %v636 = vpop.f32.mrf.mxu0
    %v637 = vadd.f32 0.0, %v636
    %638 = vmatprep.mubr.bf16.mxu0 0
    %639 = vmatmul.mubr.bf16.gmra.mxu0 %v264
    %v640 = vpop.f32.mrf.mxu0
    %v641 = vadd.f32 0.0, %v640
    %v642 = vpop.f32.mrf.mxu0
    %v643 = vadd.f32 0.0, %v642
    %v644 = vpop.f32.mrf.mxu0
    %v645 = vadd.f32 0.0, %v644
    %v646 = vpop.f32.mrf.mxu0
    %v647 = vadd.f32 0.0, %v646
    %648 = vmatprep.mubr.bf16.mxu0 0
    %649 = vmatmul.mubr.bf16.gmra.mxu0 %v265
    %v650 = vpop.f32.mrf.mxu0
    %v651 = vadd.f32 0.0, %v650
    %v652 = vpop.f32.mrf.mxu0
    %v653 = vadd.f32 0.0, %v652
    %v654 = vpop.f32.mrf.mxu0
    %v655 = vadd.f32 0.0, %v654
    %v656 = vpop.f32.mrf.mxu0
    %v657 = vadd.f32 0.0, %v656
    %658 = vmatprep.mubr.bf16.mxu0 0
    %659 = vmatmul.mubr.bf16.gmra.mxu0 %v266
    %v660 = vpop.f32.mrf.mxu0
    %v661 = vadd.f32 0.0, %v660
    %v662 = vpop.f32.mrf.mxu0
    %v663 = vadd.f32 0.0, %v662
    %v664 = vpop.f32.mrf.mxu0
    %v665 = vadd.f32 0.0, %v664
    %v666 = vpop.f32.mrf.mxu0
    %v667 = vadd.f32 0.0, %v666
    %668 = vmatprep.mubr.bf16.mxu0 0
    %669 = vmatmul.mubr.bf16.gmra.mxu0 %v267
    %v670 = vpop.f32.mrf.mxu0
    %v671 = vadd.f32 0.0, %v670
    %v672 = vpop.f32.mrf.mxu0
    %v673 = vadd.f32 0.0, %v672
    %v674 = vpop.f32.mrf.mxu0
    %v675 = vadd.f32 0.0, %v674
    %v676 = vpop.f32.mrf.mxu0
    %v677 = vadd.f32 0.0, %v676
    %678 = vmatprep.mubr.bf16.mxu0 0
    %679 = vmatmul.mubr.bf16.gmra.mxu0 %v268
    %v680 = vpop.f32.mrf.mxu0
    %v681 = vadd.f32 0.0, %v680
    %v682 = vpop.f32.mrf.mxu0
    %v683 = vadd.f32 0.0, %v682
    %v684 = vpop.f32.mrf.mxu0
    %v685 = vadd.f32 0.0, %v684
    %v686 = vpop.f32.mrf.mxu0
    %v687 = vadd.f32 0.0, %v686
    %688 = vmatprep.mubr.bf16.mxu0 0
    %689 = vmatmul.mubr.bf16.gmra.mxu0 %v269
    %v690 = vpop.f32.mrf.mxu0
    %v691 = vadd.f32 0.0, %v690
    %v692 = vpop.f32.mrf.mxu0
    %v693 = vadd.f32 0.0, %v692
    %v694 = vpop.f32.mrf.mxu0
    %v695 = vadd.f32 0.0, %v694
    %v696 = vpop.f32.mrf.mxu0
    %v697 = vadd.f32 0.0, %v696
    %698 = vmatprep.mubr.bf16.mxu0 0
    %699 = vmatmul.mubr.bf16.gmra.mxu0 %v270
    %v700 = vpop.f32.mrf.mxu0
    %v701 = vadd.f32 0.0, %v700
    %v702 = vpop.f32.mrf.mxu0
    %v703 = vadd.f32 0.0, %v702
    %v704 = vpop.f32.mrf.mxu0
    %v705 = vadd.f32 0.0, %v704
    %v706 = vpop.f32.mrf.mxu0
    %v707 = vadd.f32 0.0, %v706
    %708 = vmatprep.mubr.bf16.mxu0 0
    %709 = vmatmul.mubr.bf16.gmra.mxu0 %v271
    %v710 = vpop.f32.mrf.mxu0
    %v711 = vadd.f32 0.0, %v710
    %v712 = vpop.f32.mrf.mxu0
    %v713 = vadd.f32 0.0, %v712
    %v714 = vpop.f32.mrf.mxu0
    %v715 = vadd.f32 0.0, %v714
    %v716 = vpop.f32.mrf.mxu0
    %v717 = vadd.f32 0.0, %v716
    %718 = vmatprep.mubr.bf16.mxu0 0
    %719 = vmatmul.mubr.bf16.gmra.mxu0 %v272
    %v720 = vpop.f32.mrf.mxu0
    %v721 = vadd.f32 0.0, %v720
    %v722 = vpop.f32.mrf.mxu0
    %v723 = vadd.f32 0.0, %v722
    %v724 = vpop.f32.mrf.mxu0
    %v725 = vadd.f32 0.0, %v724
    %v726 = vpop.f32.mrf.mxu0
    %v727 = vadd.f32 0.0, %v726
    %728 = vmatprep.mubr.bf16.mxu0 0
    %729 = vmatmul.mubr.bf16.gmra.mxu0 %v273
    %v730 = vpop.f32.mrf.mxu0
    %v731 = vadd.f32 0.0, %v730
    %v732 = vpop.f32.mrf.mxu0
    %v733 = vadd.f32 0.0, %v732
    %v734 = vpop.f32.mrf.mxu0
    %v735 = vadd.f32 0.0, %v734
    %v736 = vpop.f32.mrf.mxu0
    %v737 = vadd.f32 0.0, %v736
    %738 = vdwg.mxu0
    %v739 = vld [vmem:[%s2] sm:$0xff]
    %v740 = vld [vmem:[%s2 + $0x8] sm:$0xff]
    %v741 = vld [vmem:[%s2 + $0x10] sm:$0xff]
    %v742 = vld [vmem:[%s2 + $0x18] sm:$0xff]
    %v743 = vld [vmem:[%s2 + $0x20] sm:$0xff]
    %v744 = vld [vmem:[%s2 + $0x28] sm:$0xff]
    %v745 = vld [vmem:[%s2 + $0x30] sm:$0xff]
    %v746 = vld [vmem:[%s2 + $0x38] sm:$0xff]
    %v747 = vld [vmem:[%s2 + $0x40] sm:$0xff]
    %v748 = vld [vmem:[%s2 + $0x48] sm:$0xff]
    %v749 = vld [vmem:[%s2 + $0x50] sm:$0xff]
    %v750 = vld [vmem:[%s2 + $0x58] sm:$0xff]
    %v751 = vld [vmem:[%s2 + $0x60] sm:$0xff]
    %v752 = vld [vmem:[%s2 + $0x68] sm:$0xff]
    %v753 = vld [vmem:[%s2 + $0x70] sm:$0xff]
    %v754 = vld [vmem:[%s2 + $0x78] sm:$0xff]
    %v755 = vld [vmem:[%s2 + $0x80] sm:$0xff]
    %v756 = vld [vmem:[%s2 + $0x88] sm:$0xff]
    %v757 = vld [vmem:[%s2 + $0x90] sm:$0xff]
    %v758 = vld [vmem:[%s2 + $0x98] sm:$0xff]
    %v759 = vld [vmem:[%s2 + $0xa0] sm:$0xff]
    %v760 = vld [vmem:[%s2 + $0xa8] sm:$0xff]
    %v761 = vld [vmem:[%s2 + $0xb0] sm:$0xff]
    %v762 = vld [vmem:[%s2 + $0xb8] sm:$0xff]
    %v763 = vld [vmem:[%s2 + $0xc0] sm:$0xff]
    %v764 = vld [vmem:[%s2 + $0xc8] sm:$0xff]
    %v765 = vld [vmem:[%s2 + $0xd0] sm:$0xff]
    %v766 = vld [vmem:[%s2 + $0xd8] sm:$0xff]
    %v767 = vld [vmem:[%s2 + $0xe0] sm:$0xff]
    %v768 = vld [vmem:[%s2 + $0xe8] sm:$0xff]
    %v769 = vld [vmem:[%s2 + $0xf0] sm:$0xff]
    %v770 = vld [vmem:[%s2 + $0xf8] sm:$0xff]
    %771 = vmatprep.subr.mxu0 0.0
    %772 = vmatpush1.msra.mxu0 %v754
    %773 = vmatprep.subr.mxu0 0.0
    %774 = vmatpush1.msra.mxu0 %v753
    %775 = vmatprep.subr.mxu0 0.0
    %776 = vmatpush1.msra.mxu0 %v752
    %777 = vmatprep.subr.mxu0 0.0
    %778 = vmatpush1.msra.mxu0 %v751
    %779 = vmatprep.subr.mxu0 0.0
    %780 = vmatpush1.msra.mxu0 %v750
    %781 = vmatprep.subr.mxu0 0.0
    %782 = vmatpush1.msra.mxu0 %v749
    %783 = vmatprep.subr.mxu0 0.0
    %784 = vmatpush1.msra.mxu0 %v748
    %785 = vmatprep.subr.mxu0 0.0
    %786 = vmatpush1.msra.mxu0 %v747
    %787 = vmatprep.subr.mxu0 0.0
    %788 = vmatpush1.msra.mxu0 %v746
    %789 = vmatprep.subr.mxu0 0.0
    %790 = vmatpush1.msra.mxu0 %v745
    %791 = vmatprep.subr.mxu0 0.0
    %792 = vmatpush1.msra.mxu0 %v744
    %793 = vmatprep.subr.mxu0 0.0
    %794 = vmatpush1.msra.mxu0 %v743
    %795 = vmatprep.subr.mxu0 0.0
    %796 = vmatpush1.msra.mxu0 %v742
    %797 = vmatprep.subr.mxu0 0.0
    %798 = vmatpush1.msra.mxu0 %v741
    %799 = vmatprep.subr.mxu0 0.0
    %800 = vmatpush1.msra.mxu0 %v740
    %801 = vmatprep.subr.mxu0 0.0
    %802 = vmatpush1.msra.mxu0 %v739
    %803 = vmatprep.subr.mxu0 0.0
    %804 = vmatpush2.msra.mxu0 %v770
    %805 = vmatprep.subr.mxu0 0.0
    %806 = vmatpush2.msra.mxu0 %v769
    %807 = vmatprep.subr.mxu0 0.0
    %808 = vmatpush2.msra.mxu0 %v768
    %809 = vmatprep.subr.mxu0 0.0
    %810 = vmatpush2.msra.mxu0 %v767
    %811 = vmatprep.subr.mxu0 0.0
    %812 = vmatpush2.msra.mxu0 %v766
    %813 = vmatprep.subr.mxu0 0.0
    %814 = vmatpush2.msra.mxu0 %v765
    %815 = vmatprep.subr.mxu0 0.0
    %816 = vmatpush2.msra.mxu0 %v764
    %817 = vmatprep.subr.mxu0 0.0
    %818 = vmatpush2.msra.mxu0 %v763
    %819 = vmatprep.subr.mxu0 0.0
    %820 = vmatpush2.msra.mxu0 %v762
    %821 = vmatprep.subr.mxu0 0.0
    %822 = vmatpush2.msra.mxu0 %v761
    %823 = vmatprep.subr.mxu0 0.0
    %824 = vmatpush2.msra.mxu0 %v760
    %825 = vmatprep.subr.mxu0 0.0
    %826 = vmatpush2.msra.mxu0 %v759
    %827 = vmatprep.subr.mxu0 0.0
    %828 = vmatpush2.msra.mxu0 %v758
    %829 = vmatprep.subr.mxu0 0.0
    %830 = vmatpush2.msra.mxu0 %v757
    %831 = vmatprep.subr.mxu0 0.0
    %832 = vmatpush2.msra.mxu0 %v756
    %833 = vmatprep.subr.mxu0 0.0
    %834 = vmatpush2.msra.mxu0 %v755
    %835 = vmatprep.mubr.f32.mxu0 %v423
    %836 = vmatmul.mubr.f32.gmra.mxu0 %v421
    %v837 = vpop.f32.mrf.mxu0
    %v838 = vadd.f32 0.0, %v837
    %v839 = vpop.f32.mrf.mxu0
    %840 = vmatprep.mubr.f32.mxu0 %v427
    %841 = vmatmul.mubr.f32.gmra.mxu0 %v425
    %v842 = vpop.f32.mrf.mxu0
    %v843 = vadd.f32 0.0, %v842
    %v844 = vpop.f32.mrf.mxu0
    %845 = vmatprep.mubr.f32.mxu0 %v433
    %846 = vmatmul.mubr.f32.gmra.mxu0 %v431
    %v847 = vpop.f32.mrf.mxu0
    %v848 = vadd.f32 0.0, %v847
    %v849 = vpop.f32.mrf.mxu0
    %850 = vmatprep.mubr.f32.mxu0 %v437
    %851 = vmatmul.mubr.f32.gmra.mxu0 %v435
    %v852 = vpop.f32.mrf.mxu0
    %v853 = vadd.f32 0.0, %v852
    %v854 = vpop.f32.mrf.mxu0
    %855 = vmatprep.mubr.f32.mxu0 %v443
    %856 = vmatmul.mubr.f32.gmra.mxu0 %v441
    %v857 = vpop.f32.mrf.mxu0
    %v858 = vadd.f32 0.0, %v857
    %v859 = vpop.f32.mrf.mxu0
    %860 = vmatprep.mubr.f32.mxu0 %v447
    %861 = vmatmul.mubr.f32.gmra.mxu0 %v445
    %v862 = vpop.f32.mrf.mxu0
    %v863 = vadd.f32 0.0, %v862
    %v864 = vpop.f32.mrf.mxu0
    %865 = vmatprep.mubr.f32.mxu0 %v453
    %866 = vmatmul.mubr.f32.gmra.mxu0 %v451
    %v867 = vpop.f32.mrf.mxu0
    %v868 = vadd.f32 0.0, %v867
    %v869 = vpop.f32.mrf.mxu0
    %870 = vmatprep.mubr.f32.mxu0 %v457
    %871 = vmatmul.mubr.f32.gmra.mxu0 %v455
    %v872 = vpop.f32.mrf.mxu0
    %v873 = vadd.f32 0.0, %v872
    %v874 = vpop.f32.mrf.mxu0
    %875 = vmatprep.mubr.f32.mxu0 %v463
    %876 = vmatmul.mubr.f32.gmra.mxu0 %v461
    %v877 = vpop.f32.mrf.mxu0
    %v878 = vadd.f32 0.0, %v877
    %v879 = vpop.f32.mrf.mxu0
    %880 = vmatprep.mubr.f32.mxu0 %v467
    %881 = vmatmul.mubr.f32.gmra.mxu0 %v465
    %v882 = vpop.f32.mrf.mxu0
    %v883 = vadd.f32 0.0, %v882
    %v884 = vpop.f32.mrf.mxu0
    %885 = vmatprep.mubr.f32.mxu0 %v473
    %886 = vmatmul.mubr.f32.gmra.mxu0 %v471
    %v887 = vpop.f32.mrf.mxu0
    %v888 = vadd.f32 0.0, %v887
    %v889 = vpop.f32.mrf.mxu0
    %890 = vmatprep.mubr.f32.mxu0 %v477
    %891 = vmatmul.mubr.f32.gmra.mxu0 %v475
    %v892 = vpop.f32.mrf.mxu0
    %v893 = vadd.f32 0.0, %v892
    %v894 = vpop.f32.mrf.mxu0
    %895 = vmatprep.mubr.f32.mxu0 %v483
    %896 = vmatmul.mubr.f32.gmra.mxu0 %v481
    %v897 = vpop.f32.mrf.mxu0
    %v898 = vadd.f32 0.0, %v897
    %v899 = vpop.f32.mrf.mxu0
    %900 = vmatprep.mubr.f32.mxu0 %v487
    %901 = vmatmul.mubr.f32.gmra.mxu0 %v485
    %v902 = vpop.f32.mrf.mxu0
    %v903 = vadd.f32 0.0, %v902
    %v904 = vpop.f32.mrf.mxu0
    %905 = vmatprep.mubr.f32.mxu0 %v493
    %906 = vmatmul.mubr.f32.gmra.mxu0 %v491
    %v907 = vpop.f32.mrf.mxu0
    %v908 = vadd.f32 0.0, %v907
    %v909 = vpop.f32.mrf.mxu0
    %910 = vmatprep.mubr.f32.mxu0 %v497
    %911 = vmatmul.mubr.f32.gmra.mxu0 %v495
    %v912 = vpop.f32.mrf.mxu0
    %v913 = vadd.f32 0.0, %v912
    %v914 = vpop.f32.mrf.mxu0
    %915 = vmatprep.mubr.f32.mxu0 %v503
    %916 = vmatmul.mubr.f32.gmra.mxu0 %v501
    %v917 = vpop.f32.mrf.mxu0
    %v918 = vadd.f32 0.0, %v917
    %v919 = vpop.f32.mrf.mxu0
    %920 = vmatprep.mubr.f32.mxu0 %v507
    %921 = vmatmul.mubr.f32.gmra.mxu0 %v505
    %v922 = vpop.f32.mrf.mxu0
    %v923 = vadd.f32 0.0, %v922
    %v924 = vpop.f32.mrf.mxu0
    %925 = vmatprep.mubr.f32.mxu0 %v513
    %926 = vmatmul.mubr.f32.gmra.mxu0 %v511
    %v927 = vpop.f32.mrf.mxu0
    %v928 = vadd.f32 0.0, %v927
    %v929 = vpop.f32.mrf.mxu0
    %930 = vmatprep.mubr.f32.mxu0 %v517
    %931 = vmatmul.mubr.f32.gmra.mxu0 %v515
    %v932 = vpop.f32.mrf.mxu0
    %v933 = vadd.f32 0.0, %v932
    %v934 = vpop.f32.mrf.mxu0
    %935 = vmatprep.mubr.f32.mxu0 %v523
    %936 = vmatmul.mubr.f32.gmra.mxu0 %v521
    %v937 = vpop.f32.mrf.mxu0
    %v938 = vadd.f32 0.0, %v937
    %v939 = vpop.f32.mrf.mxu0
    %940 = vmatprep.mubr.f32.mxu0 %v527
    %941 = vmatmul.mubr.f32.gmra.mxu0 %v525
    %v942 = vpop.f32.mrf.mxu0
    %v943 = vadd.f32 0.0, %v942
    %v944 = vpop.f32.mrf.mxu0
    %945 = vmatprep.mubr.f32.mxu0 %v533
    %946 = vmatmul.mubr.f32.gmra.mxu0 %v531
    %v947 = vpop.f32.mrf.mxu0
    %v948 = vadd.f32 0.0, %v947
    %v949 = vpop.f32.mrf.mxu0
    %950 = vmatprep.mubr.f32.mxu0 %v537
    %951 = vmatmul.mubr.f32.gmra.mxu0 %v535
    %v952 = vpop.f32.mrf.mxu0
    %v953 = vadd.f32 0.0, %v952
    %v954 = vpop.f32.mrf.mxu0
    %955 = vmatprep.mubr.f32.mxu0 %v543
    %956 = vmatmul.mubr.f32.gmra.mxu0 %v541
    %v957 = vpop.f32.mrf.mxu0
    %v958 = vadd.f32 0.0, %v957
    %v959 = vpop.f32.mrf.mxu0
    %960 = vmatprep.mubr.f32.mxu0 %v547
    %961 = vmatmul.mubr.f32.gmra.mxu0 %v545
    %v962 = vpop.f32.mrf.mxu0
    %v963 = vadd.f32 0.0, %v962
    %v964 = vpop.f32.mrf.mxu0
    %965 = vmatprep.mubr.f32.mxu0 %v553
    %966 = vmatmul.mubr.f32.gmra.mxu0 %v551
    %v967 = vpop.f32.mrf.mxu0
    %v968 = vadd.f32 0.0, %v967
    %v969 = vpop.f32.mrf.mxu0
    %970 = vmatprep.mubr.f32.mxu0 %v557
    %971 = vmatmul.mubr.f32.gmra.mxu0 %v555
    %v972 = vpop.f32.mrf.mxu0
    %v973 = vadd.f32 0.0, %v972
    %v974 = vpop.f32.mrf.mxu0
    %975 = vmatprep.mubr.f32.mxu0 %v563
    %976 = vmatmul.mubr.f32.gmra.mxu0 %v561
    %v977 = vpop.f32.mrf.mxu0
    %v978 = vadd.f32 0.0, %v977
    %v979 = vpop.f32.mrf.mxu0
    %980 = vmatprep.mubr.f32.mxu0 %v567
    %981 = vmatmul.mubr.f32.gmra.mxu0 %v565
    %v982 = vpop.f32.mrf.mxu0
    %v983 = vadd.f32 0.0, %v982
    %v984 = vpop.f32.mrf.mxu0
    %985 = vmatprep.mubr.f32.mxu0 %v573
    %986 = vmatmul.mubr.f32.gmra.mxu0 %v571
    %v987 = vpop.f32.mrf.mxu0
    %v988 = vadd.f32 0.0, %v987
    %v989 = vpop.f32.mrf.mxu0
    %990 = vmatprep.mubr.f32.mxu0 %v577
    %991 = vmatmul.mubr.f32.gmra.mxu0 %v575
    %v992 = vpop.f32.mrf.mxu0
    %v993 = vadd.f32 0.0, %v992
    %v994 = vpop.f32.mrf.mxu0
    %995 = vmatprep.mubr.f32.mxu0 %v583
    %996 = vmatmul.mubr.f32.gmra.mxu0 %v581
    %v997 = vpop.f32.mrf.mxu0
    %v998 = vadd.f32 0.0, %v997
    %v999 = vpop.f32.mrf.mxu0
    %1000 = vmatprep.mubr.f32.mxu0 %v587
    %1001 = vmatmul.mubr.f32.gmra.mxu0 %v585
    %v1002 = vpop.f32.mrf.mxu0
    %v1003 = vadd.f32 0.0, %v1002
    %v1004 = vpop.f32.mrf.mxu0
    %1005 = vmatprep.mubr.f32.mxu0 %v593
    %1006 = vmatmul.mubr.f32.gmra.mxu0 %v591
    %v1007 = vpop.f32.mrf.mxu0
    %v1008 = vadd.f32 0.0, %v1007
    %v1009 = vpop.f32.mrf.mxu0
    %1010 = vmatprep.mubr.f32.mxu0 %v597
    %1011 = vmatmul.mubr.f32.gmra.mxu0 %v595
    %v1012 = vpop.f32.mrf.mxu0
    %v1013 = vadd.f32 0.0, %v1012
    %v1014 = vpop.f32.mrf.mxu0
    %1015 = vmatprep.mubr.f32.mxu0 %v603
    %1016 = vmatmul.mubr.f32.gmra.mxu0 %v601
    %v1017 = vpop.f32.mrf.mxu0
    %v1018 = vadd.f32 0.0, %v1017
    %v1019 = vpop.f32.mrf.mxu0
    %1020 = vmatprep.mubr.f32.mxu0 %v607
    %1021 = vmatmul.mubr.f32.gmra.mxu0 %v605
    %v1022 = vpop.f32.mrf.mxu0
    %v1023 = vadd.f32 0.0, %v1022
    %v1024 = vpop.f32.mrf.mxu0
    %1025 = vmatprep.mubr.f32.mxu0 %v613
    %1026 = vmatmul.mubr.f32.gmra.mxu0 %v611
    %v1027 = vpop.f32.mrf.mxu0
    %v1028 = vadd.f32 0.0, %v1027
    %v1029 = vpop.f32.mrf.mxu0
    %1030 = vmatprep.mubr.f32.mxu0 %v617
    %1031 = vmatmul.mubr.f32.gmra.mxu0 %v615
    %v1032 = vpop.f32.mrf.mxu0
    %v1033 = vadd.f32 0.0, %v1032
    %v1034 = vpop.f32.mrf.mxu0
    %1035 = vmatprep.mubr.f32.mxu0 %v623
    %1036 = vmatmul.mubr.f32.gmra.mxu0 %v621
    %v1037 = vpop.f32.mrf.mxu0
    %v1038 = vadd.f32 0.0, %v1037
    %v1039 = vpop.f32.mrf.mxu0
    %1040 = vmatprep.mubr.f32.mxu0 %v627
    %1041 = vmatmul.mubr.f32.gmra.mxu0 %v625
    %v1042 = vpop.f32.mrf.mxu0
    %v1043 = vadd.f32 0.0, %v1042
    %v1044 = vpop.f32.mrf.mxu0
    %1045 = vmatprep.mubr.f32.mxu0 %v633
    %1046 = vmatmul.mubr.f32.gmra.mxu0 %v631
    %v1047 = vpop.f32.mrf.mxu0
    %v1048 = vadd.f32 0.0, %v1047
    %v1049 = vpop.f32.mrf.mxu0
    %1050 = vmatprep.mubr.f32.mxu0 %v637
    %1051 = vmatmul.mubr.f32.gmra.mxu0 %v635
    %v1052 = vpop.f32.mrf.mxu0
    %v1053 = vadd.f32 0.0, %v1052
    %v1054 = vpop.f32.mrf.mxu0
    %1055 = vmatprep.mubr.f32.mxu0 %v643
    %1056 = vmatmul.mubr.f32.gmra.mxu0 %v641
    %v1057 = vpop.f32.mrf.mxu0
    %v1058 = vadd.f32 0.0, %v1057
    %v1059 = vpop.f32.mrf.mxu0
    %1060 = vmatprep.mubr.f32.mxu0 %v647
    %1061 = vmatmul.mubr.f32.gmra.mxu0 %v645
    %v1062 = vpop.f32.mrf.mxu0
    %v1063 = vadd.f32 0.0, %v1062
    %v1064 = vpop.f32.mrf.mxu0
    %1065 = vmatprep.mubr.f32.mxu0 %v653
    %1066 = vmatmul.mubr.f32.gmra.mxu0 %v651
    %v1067 = vpop.f32.mrf.mxu0
    %v1068 = vadd.f32 0.0, %v1067
    %v1069 = vpop.f32.mrf.mxu0
    %1070 = vmatprep.mubr.f32.mxu0 %v657
    %1071 = vmatmul.mubr.f32.gmra.mxu0 %v655
    %v1072 = vpop.f32.mrf.mxu0
    %v1073 = vadd.f32 0.0, %v1072
    %v1074 = vpop.f32.mrf.mxu0
    %1075 = vmatprep.mubr.f32.mxu0 %v663
    %1076 = vmatmul.mubr.f32.gmra.mxu0 %v661
    %v1077 = vpop.f32.mrf.mxu0
    %v1078 = vadd.f32 0.0, %v1077
    %v1079 = vpop.f32.mrf.mxu0
    %1080 = vmatprep.mubr.f32.mxu0 %v667
    %1081 = vmatmul.mubr.f32.gmra.mxu0 %v665
    %v1082 = vpop.f32.mrf.mxu0
    %v1083 = vadd.f32 0.0, %v1082
    %v1084 = vpop.f32.mrf.mxu0
    %1085 = vmatprep.mubr.f32.mxu0 %v673
    %1086 = vmatmul.mubr.f32.gmra.mxu0 %v671
    %v1087 = vpop.f32.mrf.mxu0
    %v1088 = vadd.f32 0.0, %v1087
    %v1089 = vpop.f32.mrf.mxu0
    %1090 = vmatprep.mubr.f32.mxu0 %v677
    %1091 = vmatmul.mubr.f32.gmra.mxu0 %v675
    %v1092 = vpop.f32.mrf.mxu0
    %v1093 = vadd.f32 0.0, %v1092
    %v1094 = vpop.f32.mrf.mxu0
    %1095 = vmatprep.mubr.f32.mxu0 %v683
    %1096 = vmatmul.mubr.f32.gmra.mxu0 %v681
    %v1097 = vpop.f32.mrf.mxu0
    %v1098 = vadd.f32 0.0, %v1097
    %v1099 = vpop.f32.mrf.mxu0
    %1100 = vmatprep.mubr.f32.mxu0 %v687
    %1101 = vmatmul.mubr.f32.gmra.mxu0 %v685
    %v1102 = vpop.f32.mrf.mxu0
    %v1103 = vadd.f32 0.0, %v1102
    %v1104 = vpop.f32.mrf.mxu0
    %1105 = vmatprep.mubr.f32.mxu0 %v693
    %1106 = vmatmul.mubr.f32.gmra.mxu0 %v691
    %v1107 = vpop.f32.mrf.mxu0
    %v1108 = vadd.f32 0.0, %v1107
    %v1109 = vpop.f32.mrf.mxu0
    %1110 = vmatprep.mubr.f32.mxu0 %v697
    %1111 = vmatmul.mubr.f32.gmra.mxu0 %v695
    %v1112 = vpop.f32.mrf.mxu0
    %v1113 = vadd.f32 0.0, %v1112
    %v1114 = vpop.f32.mrf.mxu0
    %1115 = vmatprep.mubr.f32.mxu0 %v703
    %1116 = vmatmul.mubr.f32.gmra.mxu0 %v701
    %v1117 = vpop.f32.mrf.mxu0
    %v1118 = vadd.f32 0.0, %v1117
    %v1119 = vpop.f32.mrf.mxu0
    %1120 = vmatprep.mubr.f32.mxu0 %v707
    %1121 = vmatmul.mubr.f32.gmra.mxu0 %v705
    %v1122 = vpop.f32.mrf.mxu0
    %v1123 = vadd.f32 0.0, %v1122
    %v1124 = vpop.f32.mrf.mxu0
    %1125 = vmatprep.mubr.f32.mxu0 %v713
    %1126 = vmatmul.mubr.f32.gmra.mxu0 %v711
    %v1127 = vpop.f32.mrf.mxu0
    %v1128 = vadd.f32 0.0, %v1127
    %v1129 = vpop.f32.mrf.mxu0
    %1130 = vmatprep.mubr.f32.mxu0 %v717
    %1131 = vmatmul.mubr.f32.gmra.mxu0 %v715
    %v1132 = vpop.f32.mrf.mxu0
    %v1133 = vadd.f32 0.0, %v1132
    %v1134 = vpop.f32.mrf.mxu0
    %1135 = vmatprep.mubr.f32.mxu0 %v723
    %1136 = vmatmul.mubr.f32.gmra.mxu0 %v721
    %v1137 = vpop.f32.mrf.mxu0
    %v1138 = vadd.f32 0.0, %v1137
    %v1139 = vpop.f32.mrf.mxu0
    %1140 = vmatprep.mubr.f32.mxu0 %v727
    %1141 = vmatmul.mubr.f32.gmra.mxu0 %v725
    %v1142 = vpop.f32.mrf.mxu0
    %v1143 = vadd.f32 0.0, %v1142
    %v1144 = vpop.f32.mrf.mxu0
    %1145 = vmatprep.mubr.f32.mxu0 %v733
    %1146 = vmatmul.mubr.f32.gmra.mxu0 %v731
    %v1147 = vpop.f32.mrf.mxu0
    %v1148 = vadd.f32 0.0, %v1147
    %v1149 = vpop.f32.mrf.mxu0
    %1150 = vmatprep.mubr.f32.mxu0 %v737
    %1151 = vmatmul.mubr.f32.gmra.mxu0 %v735
    %v1152 = vpop.f32.mrf.mxu0
    %v1153 = vadd.f32 0.0, %v1152
    %v1154 = vpop.f32.mrf.mxu0
    %1155 = vdwg.mxu0
    %vm1156 = vcmask 31744
    %1157 = vst.msk [vmem:[%s5] sm:$0xff] %vm1156, %v838
    %1158 = vst.msk [vmem:[%s5 + $0x8] sm:$0xff] %vm1156, %v843
    %1159 = vst.msk [vmem:[%s5 + $0x10] sm:$0xff] %vm1156, %v848
    %1160 = vst.msk [vmem:[%s5 + $0x18] sm:$0xff] %vm1156, %v853
    %1161 = vst.msk [vmem:[%s5 + $0x20] sm:$0xff] %vm1156, %v858
    %1162 = vst.msk [vmem:[%s5 + $0x28] sm:$0xff] %vm1156, %v863
    %1163 = vst.msk [vmem:[%s5 + $0x30] sm:$0xff] %vm1156, %v868
    %1164 = vst.msk [vmem:[%s5 + $0x38] sm:$0xff] %vm1156, %v873
    %1165 = vst.msk [vmem:[%s5 + $0x40] sm:$0xff] %vm1156, %v878
    %1166 = vst.msk [vmem:[%s5 + $0x48] sm:$0xff] %vm1156, %v883
    %1167 = vst.msk [vmem:[%s5 + $0x50] sm:$0xff] %vm1156, %v888
    %1168 = vst.msk [vmem:[%s5 + $0x58] sm:$0xff] %vm1156, %v893
    %1169 = vst.msk [vmem:[%s5 + $0x60] sm:$0xff] %vm1156, %v898
    %1170 = vst.msk [vmem:[%s5 + $0x68] sm:$0xff] %vm1156, %v903
    %1171 = vst.msk [vmem:[%s5 + $0x70] sm:$0xff] %vm1156, %v908
    %1172 = vst.msk [vmem:[%s5 + $0x78] sm:$0xff] %vm1156, %v913
    %1173 = vst.msk [vmem:[%s5 + $0x80] sm:$0xff] %vm1156, %v918
    %1174 = vst.msk [vmem:[%s5 + $0x88] sm:$0xff] %vm1156, %v923
    %1175 = vst.msk [vmem:[%s5 + $0x90] sm:$0xff] %vm1156, %v928
    %1176 = vst.msk [vmem:[%s5 + $0x98] sm:$0xff] %vm1156, %v933
    %1177 = vst.msk [vmem:[%s5 + $0xa0] sm:$0xff] %vm1156, %v938
    %1178 = vst.msk [vmem:[%s5 + $0xa8] sm:$0xff] %vm1156, %v943
    %1179 = vst.msk [vmem:[%s5 + $0xb0] sm:$0xff] %vm1156, %v948
    %1180 = vst.msk [vmem:[%s5 + $0xb8] sm:$0xff] %vm1156, %v953
    %1181 = vst.msk [vmem:[%s5 + $0xc0] sm:$0xff] %vm1156, %v958
    %1182 = vst.msk [vmem:[%s5 + $0xc8] sm:$0xff] %vm1156, %v963
    %1183 = vst.msk [vmem:[%s5 + $0xd0] sm:$0xff] %vm1156, %v968
    %1184 = vst.msk [vmem:[%s5 + $0xd8] sm:$0xff] %vm1156, %v973
    %1185 = vst.msk [vmem:[%s5 + $0xe0] sm:$0xff] %vm1156, %v978
    %1186 = vst.msk [vmem:[%s5 + $0xe8] sm:$0xff] %vm1156, %v983
    %1187 = vst.msk [vmem:[%s5 + $0xf0] sm:$0xff] %vm1156, %v988
    %1188 = vst.msk [vmem:[%s5 + $0xf8] sm:$0xff] %vm1156, %v993
    %1189 = vst.msk [vmem:[%s5 + $0x100] sm:$0xff] %vm1156, %v998
    %1190 = vst.msk [vmem:[%s5 + $0x108] sm:$0xff] %vm1156, %v1003
    %1191 = vst.msk [vmem:[%s5 + $0x110] sm:$0xff] %vm1156, %v1008
    %1192 = vst.msk [vmem:[%s5 + $0x118] sm:$0xff] %vm1156, %v1013
    %1193 = vst.msk [vmem:[%s5 + $0x120] sm:$0xff] %vm1156, %v1018
    %1194 = vst.msk [vmem:[%s5 + $0x128] sm:$0xff] %vm1156, %v1023
    %1195 = vst.msk [vmem:[%s5 + $0x130] sm:$0xff] %vm1156, %v1028
    %1196 = vst.msk [vmem:[%s5 + $0x138] sm:$0xff] %vm1156, %v1033
    %1197 = vst.msk [vmem:[%s5 + $0x140] sm:$0xff] %vm1156, %v1038
    %1198 = vst.msk [vmem:[%s5 + $0x148] sm:$0xff] %vm1156, %v1043
    %1199 = vst.msk [vmem:[%s5 + $0x150] sm:$0xff] %vm1156, %v1048
    %1200 = vst.msk [vmem:[%s5 + $0x158] sm:$0xff] %vm1156, %v1053
    %1201 = vst.msk [vmem:[%s5 + $0x160] sm:$0xff] %vm1156, %v1058
    %1202 = vst.msk [vmem:[%s5 + $0x168] sm:$0xff] %vm1156, %v1063
    %1203 = vst.msk [vmem:[%s5 + $0x170] sm:$0xff] %vm1156, %v1068
    %1204 = vst.msk [vmem:[%s5 + $0x178] sm:$0xff] %vm1156, %v1073
    %1205 = vst.msk [vmem:[%s5 + $0x180] sm:$0xff] %vm1156, %v1078
    %1206 = vst.msk [vmem:[%s5 + $0x188] sm:$0xff] %vm1156, %v1083
    %1207 = vst.msk [vmem:[%s5 + $0x190] sm:$0xff] %vm1156, %v1088
    %1208 = vst.msk [vmem:[%s5 + $0x198] sm:$0xff] %vm1156, %v1093
    %1209 = vst.msk [vmem:[%s5 + $0x1a0] sm:$0xff] %vm1156, %v1098
    %1210 = vst.msk [vmem:[%s5 + $0x1a8] sm:$0xff] %vm1156, %v1103
    %1211 = vst.msk [vmem:[%s5 + $0x1b0] sm:$0xff] %vm1156, %v1108
    %1212 = vst.msk [vmem:[%s5 + $0x1b8] sm:$0xff] %vm1156, %v1113
    %1213 = vst.msk [vmem:[%s5 + $0x1c0] sm:$0xff] %vm1156, %v1118
    %1214 = vst.msk [vmem:[%s5 + $0x1c8] sm:$0xff] %vm1156, %v1123
    %1215 = vst.msk [vmem:[%s5 + $0x1d0] sm:$0xff] %vm1156, %v1128
    %1216 = vst.msk [vmem:[%s5 + $0x1d8] sm:$0xff] %vm1156, %v1133
    %1217 = vst.msk [vmem:[%s5 + $0x1e0] sm:$0xff] %vm1156, %v1138
    %1218 = vst.msk [vmem:[%s5 + $0x1e8] sm:$0xff] %vm1156, %v1143
    %1219 = vst.msk [vmem:[%s5 + $0x1f0] sm:$0xff] %vm1156, %v1148
    %1220 = vst.msk [vmem:[%s5 + $0x1f8] sm:$0xff] %vm1156, %v1153
    %v1221 = vlaneseq
    %v1222 = vand.u32 %v1221, 127
    %vm1223 = vcmp.eq.s32.totalorder %v1222, 32
    %v1224 = vsel %vm1223, 1, 0
    %v1225 = vcvt.s32.f32 %v1224
    %v1226 = vadd.f32 %v421, %v1225
    %v1227 = vadd.f32 %v425, %v1225
    %v1228 = vadd.f32 %v431, %v1225
    %v1229 = vadd.f32 %v435, %v1225
    %v1230 = vadd.f32 %v441, %v1225
    %v1231 = vadd.f32 %v445, %v1225
    %v1232 = vadd.f32 %v451, %v1225
    %v1233 = vadd.f32 %v455, %v1225
    %v1234 = vadd.f32 %v461, %v1225
    %v1235 = vadd.f32 %v465, %v1225
    %v1236 = vadd.f32 %v471, %v1225
    %v1237 = vadd.f32 %v475, %v1225
    %v1238 = vadd.f32 %v481, %v1225
    %v1239 = vadd.f32 %v485, %v1225
    %v1240 = vadd.f32 %v491, %v1225
    %v1241 = vadd.f32 %v495, %v1225
    %v1242 = vadd.f32 %v501, %v1225
    %v1243 = vadd.f32 %v505, %v1225
    %v1244 = vadd.f32 %v511, %v1225
    %v1245 = vadd.f32 %v515, %v1225
    %v1246 = vadd.f32 %v521, %v1225
    %v1247 = vadd.f32 %v525, %v1225
    %v1248 = vadd.f32 %v531, %v1225
    %v1249 = vadd.f32 %v535, %v1225
    %v1250 = vadd.f32 %v541, %v1225
    %v1251 = vadd.f32 %v545, %v1225
    %v1252 = vadd.f32 %v551, %v1225
    %v1253 = vadd.f32 %v555, %v1225
    %v1254 = vadd.f32 %v561, %v1225
    %v1255 = vadd.f32 %v565, %v1225
    %v1256 = vadd.f32 %v571, %v1225
    %v1257 = vadd.f32 %v575, %v1225
    %v1258 = vadd.f32 %v581, %v1225
    %v1259 = vadd.f32 %v585, %v1225
    %v1260 = vadd.f32 %v591, %v1225
    %v1261 = vadd.f32 %v595, %v1225
    %v1262 = vadd.f32 %v601, %v1225
    %v1263 = vadd.f32 %v605, %v1225
    %v1264 = vadd.f32 %v611, %v1225
    %v1265 = vadd.f32 %v615, %v1225
    %v1266 = vadd.f32 %v621, %v1225
    %v1267 = vadd.f32 %v625, %v1225
    %v1268 = vadd.f32 %v631, %v1225
    %v1269 = vadd.f32 %v635, %v1225
    %v1270 = vadd.f32 %v641, %v1225
    %v1271 = vadd.f32 %v645, %v1225
    %v1272 = vadd.f32 %v651, %v1225
    %v1273 = vadd.f32 %v655, %v1225
    %v1274 = vadd.f32 %v661, %v1225
    %v1275 = vadd.f32 %v665, %v1225
    %v1276 = vadd.f32 %v671, %v1225
    %v1277 = vadd.f32 %v675, %v1225
    %v1278 = vadd.f32 %v681, %v1225
    %v1279 = vadd.f32 %v685, %v1225
    %v1280 = vadd.f32 %v691, %v1225
    %v1281 = vadd.f32 %v695, %v1225
    %v1282 = vadd.f32 %v701, %v1225
    %v1283 = vadd.f32 %v705, %v1225
    %v1284 = vadd.f32 %v711, %v1225
    %v1285 = vadd.f32 %v715, %v1225
    %v1286 = vadd.f32 %v721, %v1225
    %v1287 = vadd.f32 %v725, %v1225
    %v1288 = vadd.f32 %v731, %v1225
    %v1289 = vadd.f32 %v735, %v1225
    %v1290 = vpack.c.bf16 %v1227, %v1226
    %v1291 = vpack.c.bf16 %v1229, %v1228
    %v1292 = vpack.c.bf16 %v1231, %v1230
    %v1293 = vpack.c.bf16 %v1233, %v1232
    %v1294 = vpack.c.bf16 %v1235, %v1234
    %v1295 = vpack.c.bf16 %v1237, %v1236
    %v1296 = vpack.c.bf16 %v1239, %v1238
    %v1297 = vpack.c.bf16 %v1241, %v1240
    %v1298 = vpack.c.bf16 %v1243, %v1242
    %v1299 = vpack.c.bf16 %v1245, %v1244
    %v1300 = vpack.c.bf16 %v1247, %v1246
    %v1301 = vpack.c.bf16 %v1249, %v1248
    %v1302 = vpack.c.bf16 %v1251, %v1250
    %v1303 = vpack.c.bf16 %v1253, %v1252
    %v1304 = vpack.c.bf16 %v1255, %v1254
    %v1305 = vpack.c.bf16 %v1257, %v1256
    %v1306 = vpack.c.bf16 %v1259, %v1258
    %v1307 = vpack.c.bf16 %v1261, %v1260
    %v1308 = vpack.c.bf16 %v1263, %v1262
    %v1309 = vpack.c.bf16 %v1265, %v1264
    %v1310 = vpack.c.bf16 %v1267, %v1266
    %v1311 = vpack.c.bf16 %v1269, %v1268
    %v1312 = vpack.c.bf16 %v1271, %v1270
    %v1313 = vpack.c.bf16 %v1273, %v1272
    %v1314 = vpack.c.bf16 %v1275, %v1274
    %v1315 = vpack.c.bf16 %v1277, %v1276
    %v1316 = vpack.c.bf16 %v1279, %v1278
    %v1317 = vpack.c.bf16 %v1281, %v1280
    %v1318 = vpack.c.bf16 %v1283, %v1282
    %v1319 = vpack.c.bf16 %v1285, %v1284
    %v1320 = vpack.c.bf16 %v1287, %v1286
    %v1321 = vpack.c.bf16 %v1289, %v1288
    %v1354 = vunpack.c.l.b16 %v1290
    %v1355 = vunpack.c.h.b16 %v1290
    %v1356 = vunpack.c.l.b16 %v1291
    %v1357 = vunpack.c.h.b16 %v1291
    %v1358 = vunpack.c.l.b16 %v1292
    %v1359 = vunpack.c.h.b16 %v1292
    %v1360 = vunpack.c.l.b16 %v1293
    %v1361 = vunpack.c.h.b16 %v1293
    %v1362 = vunpack.c.l.b16 %v1294
    %v1363 = vunpack.c.h.b16 %v1294
    %v1364 = vunpack.c.l.b16 %v1295
    %v1365 = vunpack.c.h.b16 %v1295
    %v1366 = vunpack.c.l.b16 %v1296
    %v1367 = vunpack.c.h.b16 %v1296
    %v1368 = vunpack.c.l.b16 %v1297
    %v1369 = vunpack.c.h.b16 %v1297
    %v1370 = vunpack.c.l.b16 %v1298
    %v1371 = vunpack.c.h.b16 %v1298
    %v1372 = vunpack.c.l.b16 %v1299
    %v1373 = vunpack.c.h.b16 %v1299
    %v1374 = vunpack.c.l.b16 %v1300
    %v1375 = vunpack.c.h.b16 %v1300
    %v1376 = vunpack.c.l.b16 %v1301
    %v1377 = vunpack.c.h.b16 %v1301
    %v1378 = vunpack.c.l.b16 %v1302
    %v1379 = vunpack.c.h.b16 %v1302
    %v1380 = vunpack.c.l.b16 %v1303
    %v1381 = vunpack.c.h.b16 %v1303
    %v1382 = vunpack.c.l.b16 %v1304
    %v1383 = vunpack.c.h.b16 %v1304
    %v1384 = vunpack.c.l.b16 %v1305
    %v1385 = vunpack.c.h.b16 %v1305
    %v1386 = vunpack.c.l.b16 %v1306
    %v1387 = vunpack.c.h.b16 %v1306
    %v1388 = vunpack.c.l.b16 %v1307
    %v1389 = vunpack.c.h.b16 %v1307
    %v1390 = vunpack.c.l.b16 %v1308
    %v1391 = vunpack.c.h.b16 %v1308
    %v1392 = vunpack.c.l.b16 %v1309
    %v1393 = vunpack.c.h.b16 %v1309
    %v1394 = vunpack.c.l.b16 %v1310
    %v1395 = vunpack.c.h.b16 %v1310
    %v1396 = vunpack.c.l.b16 %v1311
    %v1397 = vunpack.c.h.b16 %v1311
    %v1398 = vunpack.c.l.b16 %v1312
    %v1399 = vunpack.c.h.b16 %v1312
    %v1400 = vunpack.c.l.b16 %v1313
    %v1401 = vunpack.c.h.b16 %v1313
    %v1402 = vunpack.c.l.b16 %v1314
    %v1403 = vunpack.c.h.b16 %v1314
    %v1404 = vunpack.c.l.b16 %v1315
    %v1405 = vunpack.c.h.b16 %v1315
    %v1406 = vunpack.c.l.b16 %v1316
    %v1407 = vunpack.c.h.b16 %v1316
    %v1408 = vunpack.c.l.b16 %v1317
    %v1409 = vunpack.c.h.b16 %v1317
    %v1410 = vunpack.c.l.b16 %v1318
    %v1411 = vunpack.c.h.b16 %v1318
    %v1412 = vunpack.c.l.b16 %v1319
    %v1413 = vunpack.c.h.b16 %v1319
    %v1414 = vunpack.c.l.b16 %v1320
    %v1415 = vunpack.c.h.b16 %v1320
    %v1416 = vunpack.c.l.b16 %v1321
    %v1417 = vunpack.c.h.b16 %v1321
    %v1418 = vpack.c.b16 %v1354, %v1354
    %v1419 = vpack.c.b16 %v1355, %v1355
    %v1420 = vpack.c.b16 %v1356, %v1356
    %v1421 = vpack.c.b16 %v1357, %v1357
    %v1422 = vpack.c.b16 %v1358, %v1358
    %v1423 = vpack.c.b16 %v1359, %v1359
    %v1424 = vpack.c.b16 %v1360, %v1360
    %v1425 = vpack.c.b16 %v1361, %v1361
    %v1426 = vpack.c.b16 %v1362, %v1362
    %v1427 = vpack.c.b16 %v1363, %v1363
    %v1428 = vpack.c.b16 %v1364, %v1364
    %v1429 = vpack.c.b16 %v1365, %v1365
    %v1430 = vpack.c.b16 %v1366, %v1366
    %v1431 = vpack.c.b16 %v1367, %v1367
    %v1432 = vpack.c.b16 %v1368, %v1368
    %v1433 = vpack.c.b16 %v1369, %v1369
    %v1434 = vpack.c.b16 %v1370, %v1370
    %v1435 = vpack.c.b16 %v1371, %v1371
    %v1436 = vpack.c.b16 %v1372, %v1372
    %v1437 = vpack.c.b16 %v1373, %v1373
    %v1438 = vpack.c.b16 %v1374, %v1374
    %v1439 = vpack.c.b16 %v1375, %v1375
    %v1440 = vpack.c.b16 %v1376, %v1376
    %v1441 = vpack.c.b16 %v1377, %v1377
    %v1442 = vpack.c.b16 %v1378, %v1378
    %v1443 = vpack.c.b16 %v1379, %v1379
    %v1444 = vpack.c.b16 %v1380, %v1380
    %v1445 = vpack.c.b16 %v1381, %v1381
    %v1446 = vpack.c.b16 %v1382, %v1382
    %v1447 = vpack.c.b16 %v1383, %v1383
    %v1448 = vpack.c.b16 %v1384, %v1384
    %v1449 = vpack.c.b16 %v1385, %v1385
    %v1450 = vpack.c.b16 %v1386, %v1386
    %v1451 = vpack.c.b16 %v1387, %v1387
    %v1452 = vpack.c.b16 %v1388, %v1388
    %v1453 = vpack.c.b16 %v1389, %v1389
    %v1454 = vpack.c.b16 %v1390, %v1390
    %v1455 = vpack.c.b16 %v1391, %v1391
    %v1456 = vpack.c.b16 %v1392, %v1392
    %v1457 = vpack.c.b16 %v1393, %v1393
    %v1458 = vpack.c.b16 %v1394, %v1394
    %v1459 = vpack.c.b16 %v1395, %v1395
    %v1460 = vpack.c.b16 %v1396, %v1396
    %v1461 = vpack.c.b16 %v1397, %v1397
    %v1462 = vpack.c.b16 %v1398, %v1398
    %v1463 = vpack.c.b16 %v1399, %v1399
    %v1464 = vpack.c.b16 %v1400, %v1400
    %v1465 = vpack.c.b16 %v1401, %v1401
    %v1466 = vpack.c.b16 %v1402, %v1402
    %v1467 = vpack.c.b16 %v1403, %v1403
    %v1468 = vpack.c.b16 %v1404, %v1404
    %v1469 = vpack.c.b16 %v1405, %v1405
    %v1470 = vpack.c.b16 %v1406, %v1406
    %v1471 = vpack.c.b16 %v1407, %v1407
    %v1472 = vpack.c.b16 %v1408, %v1408
    %v1473 = vpack.c.b16 %v1409, %v1409
    %v1474 = vpack.c.b16 %v1410, %v1410
    %v1475 = vpack.c.b16 %v1411, %v1411
    %v1476 = vpack.c.b16 %v1412, %v1412
    %v1477 = vpack.c.b16 %v1413, %v1413
    %v1478 = vpack.c.b16 %v1414, %v1414
    %v1479 = vpack.c.b16 %v1415, %v1415
    %v1480 = vpack.c.b16 %v1416, %v1416
    %v1481 = vpack.c.b16 %v1417, %v1417
    %1546 = vst [vmem:[#allocation5] sm:$0xf] %v1418
    %1547 = vst [vmem:[#allocation5 + $0x4] sm:$0xf] %v1419
    %1548 = vst [vmem:[#allocation5 + $0x8] sm:$0xf] %v1420
    %1549 = vst [vmem:[#allocation5 + $0xc] sm:$0xf] %v1421
    %1550 = vst [vmem:[#allocation5 + $0x10] sm:$0xf] %v1422
    %1551 = vst [vmem:[#allocation5 + $0x14] sm:$0xf] %v1423
    %1552 = vst [vmem:[#allocation5 + $0x18] sm:$0xf] %v1424
    %1553 = vst [vmem:[#allocation5 + $0x1c] sm:$0xf] %v1425
    %1554 = vst [vmem:[#allocation5 + $0x20] sm:$0xf] %v1426
    %1555 = vst [vmem:[#allocation5 + $0x24] sm:$0xf] %v1427
    %1556 = vst [vmem:[#allocation5 + $0x28] sm:$0xf] %v1428
    %1557 = vst [vmem:[#allocation5 + $0x2c] sm:$0xf] %v1429
    %1558 = vst [vmem:[#allocation5 + $0x30] sm:$0xf] %v1430
    %1559 = vst [vmem:[#allocation5 + $0x34] sm:$0xf] %v1431
    %1560 = vst [vmem:[#allocation5 + $0x38] sm:$0xf] %v1432
    %1561 = vst [vmem:[#allocation5 + $0x3c] sm:$0xf] %v1433
    %1562 = vst [vmem:[#allocation5 + $0x40] sm:$0xf] %v1434
    %1563 = vst [vmem:[#allocation5 + $0x44] sm:$0xf] %v1435
    %1564 = vst [vmem:[#allocation5 + $0x48] sm:$0xf] %v1436
    %1565 = vst [vmem:[#allocation5 + $0x4c] sm:$0xf] %v1437
    %1566 = vst [vmem:[#allocation5 + $0x50] sm:$0xf] %v1438
    %1567 = vst [vmem:[#allocation5 + $0x54] sm:$0xf] %v1439
    %1568 = vst [vmem:[#allocation5 + $0x58] sm:$0xf] %v1440
    %1569 = vst [vmem:[#allocation5 + $0x5c] sm:$0xf] %v1441
    %1570 = vst [vmem:[#allocation5 + $0x60] sm:$0xf] %v1442
    %1571 = vst [vmem:[#allocation5 + $0x64] sm:$0xf] %v1443
    %1572 = vst [vmem:[#allocation5 + $0x68] sm:$0xf] %v1444
    %1573 = vst [vmem:[#allocation5 + $0x6c] sm:$0xf] %v1445
    %1574 = vst [vmem:[#allocation5 + $0x70] sm:$0xf] %v1446
    %1575 = vst [vmem:[#allocation5 + $0x74] sm:$0xf] %v1447
    %1576 = vst [vmem:[#allocation5 + $0x78] sm:$0xf] %v1448
    %1577 = vst [vmem:[#allocation5 + $0x7c] sm:$0xf] %v1449
    %1578 = vst [vmem:[#allocation5 + $0x80] sm:$0xf] %v1450
    %1579 = vst [vmem:[#allocation5 + $0x84] sm:$0xf] %v1451
    %1580 = vst [vmem:[#allocation5 + $0x88] sm:$0xf] %v1452
    %1581 = vst [vmem:[#allocation5 + $0x8c] sm:$0xf] %v1453
    %1582 = vst [vmem:[#allocation5 + $0x90] sm:$0xf] %v1454
    %1583 = vst [vmem:[#allocation5 + $0x94] sm:$0xf] %v1455
    %1584 = vst [vmem:[#allocation5 + $0x98] sm:$0xf] %v1456
    %1585 = vst [vmem:[#allocation5 + $0x9c] sm:$0xf] %v1457
    %1586 = vst [vmem:[#allocation5 + $0xa0] sm:$0xf] %v1458
    %1587 = vst [vmem:[#allocation5 + $0xa4] sm:$0xf] %v1459
    %1588 = vst [vmem:[#allocation5 + $0xa8] sm:$0xf] %v1460
    %1589 = vst [vmem:[#allocation5 + $0xac] sm:$0xf] %v1461
    %1590 = vst [vmem:[#allocation5 + $0xb0] sm:$0xf] %v1462
    %1591 = vst [vmem:[#allocation5 + $0xb4] sm:$0xf] %v1463
    %1592 = vst [vmem:[#allocation5 + $0xb8] sm:$0xf] %v1464
    %1593 = vst [vmem:[#allocation5 + $0xbc] sm:$0xf] %v1465
    %1594 = vst [vmem:[#allocation5 + $0xc0] sm:$0xf] %v1466
    %1595 = vst [vmem:[#allocation5 + $0xc4] sm:$0xf] %v1467
    %1596 = vst [vmem:[#allocation5 + $0xc8] sm:$0xf] %v1468
    %1597 = vst [vmem:[#allocation5 + $0xcc] sm:$0xf] %v1469
    %1598 = vst [vmem:[#allocation5 + $0xd0] sm:$0xf] %v1470
    %1599 = vst [vmem:[#allocation5 + $0xd4] sm:$0xf] %v1471
    %1600 = vst [vmem:[#allocation5 + $0xd8] sm:$0xf] %v1472
    %1601 = vst [vmem:[#allocation5 + $0xdc] sm:$0xf] %v1473
    %1602 = vst [vmem:[#allocation5 + $0xe0] sm:$0xf] %v1474
    %1603 = vst [vmem:[#allocation5 + $0xe4] sm:$0xf] %v1475
    %1604 = vst [vmem:[#allocation5 + $0xe8] sm:$0xf] %v1476
    %1605 = vst [vmem:[#allocation5 + $0xec] sm:$0xf] %v1477
    %1606 = vst [vmem:[#allocation5 + $0xf0] sm:$0xf] %v1478
    %1607 = vst [vmem:[#allocation5 + $0xf4] sm:$0xf] %v1479
    %1608 = vst [vmem:[#allocation5 + $0xf8] sm:$0xf] %v1480
    %1609 = vst [vmem:[#allocation5 + $0xfc] sm:$0xf] %v1481
    %v1610 = vadd.f32 %v423, %v1225
    %v1611 = vadd.f32 %v427, %v1225
    %v1612 = vadd.f32 %v433, %v1225
    %v1613 = vadd.f32 %v437, %v1225
    %v1614 = vadd.f32 %v443, %v1225
    %v1615 = vadd.f32 %v447, %v1225
    %v1616 = vadd.f32 %v453, %v1225
    %v1617 = vadd.f32 %v457, %v1225
    %v1618 = vadd.f32 %v463, %v1225
    %v1619 = vadd.f32 %v467, %v1225
    %v1620 = vadd.f32 %v473, %v1225
    %v1621 = vadd.f32 %v477, %v1225
    %v1622 = vadd.f32 %v483, %v1225
    %v1623 = vadd.f32 %v487, %v1225
    %v1624 = vadd.f32 %v493, %v1225
    %v1625 = vadd.f32 %v497, %v1225
    %v1626 = vadd.f32 %v503, %v1225
    %v1627 = vadd.f32 %v507, %v1225
    %v1628 = vadd.f32 %v513, %v1225
    %v1629 = vadd.f32 %v517, %v1225
    %v1630 = vadd.f32 %v523, %v1225
    %v1631 = vadd.f32 %v527, %v1225
    %v1632 = vadd.f32 %v533, %v1225
    %v1633 = vadd.f32 %v537, %v1225
    %v1634 = vadd.f32 %v543, %v1225
    %v1635 = vadd.f32 %v547, %v1225
    %v1636 = vadd.f32 %v553, %v1225
    %v1637 = vadd.f32 %v557, %v1225
    %v1638 = vadd.f32 %v563, %v1225
    %v1639 = vadd.f32 %v567, %v1225
    %v1640 = vadd.f32 %v573, %v1225
    %v1641 = vadd.f32 %v577, %v1225
    %v1642 = vadd.f32 %v583, %v1225
    %v1643 = vadd.f32 %v587, %v1225
    %v1644 = vadd.f32 %v593, %v1225
    %v1645 = vadd.f32 %v597, %v1225
    %v1646 = vadd.f32 %v603, %v1225
    %v1647 = vadd.f32 %v607, %v1225
    %v1648 = vadd.f32 %v613, %v1225
    %v1649 = vadd.f32 %v617, %v1225
    %v1650 = vadd.f32 %v623, %v1225
    %v1651 = vadd.f32 %v627, %v1225
    %v1652 = vadd.f32 %v633, %v1225
    %v1653 = vadd.f32 %v637, %v1225
    %v1654 = vadd.f32 %v643, %v1225
    %v1655 = vadd.f32 %v647, %v1225
    %v1656 = vadd.f32 %v653, %v1225
    %v1657 = vadd.f32 %v657, %v1225
    %v1658 = vadd.f32 %v663, %v1225
    %v1659 = vadd.f32 %v667, %v1225
    %v1660 = vadd.f32 %v673, %v1225
    %v1661 = vadd.f32 %v677, %v1225
    %v1662 = vadd.f32 %v683, %v1225
    %v1663 = vadd.f32 %v687, %v1225
    %v1664 = vadd.f32 %v693, %v1225
    %v1665 = vadd.f32 %v697, %v1225
    %v1666 = vadd.f32 %v703, %v1225
    %v1667 = vadd.f32 %v707, %v1225
    %v1668 = vadd.f32 %v713, %v1225
    %v1669 = vadd.f32 %v717, %v1225
    %v1670 = vadd.f32 %v723, %v1225
    %v1671 = vadd.f32 %v727, %v1225
    %v1672 = vadd.f32 %v733, %v1225
    %v1673 = vadd.f32 %v737, %v1225
    %v1674 = vpack.c.bf16 %v1611, %v1610
    %v1675 = vpack.c.bf16 %v1613, %v1612
    %v1676 = vpack.c.bf16 %v1615, %v1614
    %v1677 = vpack.c.bf16 %v1617, %v1616
    %v1678 = vpack.c.bf16 %v1619, %v1618
    %v1679 = vpack.c.bf16 %v1621, %v1620
    %v1680 = vpack.c.bf16 %v1623, %v1622
    %v1681 = vpack.c.bf16 %v1625, %v1624
    %v1682 = vpack.c.bf16 %v1627, %v1626
    %v1683 = vpack.c.bf16 %v1629, %v1628
    %v1684 = vpack.c.bf16 %v1631, %v1630
    %v1685 = vpack.c.bf16 %v1633, %v1632
    %v1686 = vpack.c.bf16 %v1635, %v1634
    %v1687 = vpack.c.bf16 %v1637, %v1636
    %v1688 = vpack.c.bf16 %v1639, %v1638
    %v1689 = vpack.c.bf16 %v1641, %v1640
    %v1690 = vpack.c.bf16 %v1643, %v1642
    %v1691 = vpack.c.bf16 %v1645, %v1644
    %v1692 = vpack.c.bf16 %v1647, %v1646
    %v1693 = vpack.c.bf16 %v1649, %v1648
    %v1694 = vpack.c.bf16 %v1651, %v1650
    %v1695 = vpack.c.bf16 %v1653, %v1652
    %v1696 = vpack.c.bf16 %v1655, %v1654
    %v1697 = vpack.c.bf16 %v1657, %v1656
    %v1698 = vpack.c.bf16 %v1659, %v1658
    %v1699 = vpack.c.bf16 %v1661, %v1660
    %v1700 = vpack.c.bf16 %v1663, %v1662
    %v1701 = vpack.c.bf16 %v1665, %v1664
    %v1702 = vpack.c.bf16 %v1667, %v1666
    %v1703 = vpack.c.bf16 %v1669, %v1668
    %v1704 = vpack.c.bf16 %v1671, %v1670
    %v1705 = vpack.c.bf16 %v1673, %v1672
    %v1738 = vunpack.c.l.b16 %v1674
    %v1739 = vunpack.c.h.b16 %v1674
    %v1740 = vunpack.c.l.b16 %v1675
    %v1741 = vunpack.c.h.b16 %v1675
    %v1742 = vunpack.c.l.b16 %v1676
    %v1743 = vunpack.c.h.b16 %v1676
    %v1744 = vunpack.c.l.b16 %v1677
    %v1745 = vunpack.c.h.b16 %v1677
    %v1746 = vunpack.c.l.b16 %v1678
    %v1747 = vunpack.c.h.b16 %v1678
    %v1748 = vunpack.c.l.b16 %v1679
    %v1749 = vunpack.c.h.b16 %v1679
    %v1750 = vunpack.c.l.b16 %v1680
    %v1751 = vunpack.c.h.b16 %v1680
    %v1752 = vunpack.c.l.b16 %v1681
    %v1753 = vunpack.c.h.b16 %v1681
    %v1754 = vunpack.c.l.b16 %v1682
    %v1755 = vunpack.c.h.b16 %v1682
    %v1756 = vunpack.c.l.b16 %v1683
    %v1757 = vunpack.c.h.b16 %v1683
    %v1758 = vunpack.c.l.b16 %v1684
    %v1759 = vunpack.c.h.b16 %v1684
    %v1760 = vunpack.c.l.b16 %v1685
    %v1761 = vunpack.c.h.b16 %v1685
    %v1762 = vunpack.c.l.b16 %v1686
    %v1763 = vunpack.c.h.b16 %v1686
    %v1764 = vunpack.c.l.b16 %v1687
    %v1765 = vunpack.c.h.b16 %v1687
    %v1766 = vunpack.c.l.b16 %v1688
    %v1767 = vunpack.c.h.b16 %v1688
    %v1768 = vunpack.c.l.b16 %v1689
    %v1769 = vunpack.c.h.b16 %v1689
    %v1770 = vunpack.c.l.b16 %v1690
    %v1771 = vunpack.c.h.b16 %v1690
    %v1772 = vunpack.c.l.b16 %v1691
    %v1773 = vunpack.c.h.b16 %v1691
    %v1774 = vunpack.c.l.b16 %v1692
    %v1775 = vunpack.c.h.b16 %v1692
    %v1776 = vunpack.c.l.b16 %v1693
    %v1777 = vunpack.c.h.b16 %v1693
    %v1778 = vunpack.c.l.b16 %v1694
    %v1779 = vunpack.c.h.b16 %v1694
    %v1780 = vunpack.c.l.b16 %v1695
    %v1781 = vunpack.c.h.b16 %v1695
    %v1782 = vunpack.c.l.b16 %v1696
    %v1783 = vunpack.c.h.b16 %v1696
    %v1784 = vunpack.c.l.b16 %v1697
    %v1785 = vunpack.c.h.b16 %v1697
    %v1786 = vunpack.c.l.b16 %v1698
    %v1787 = vunpack.c.h.b16 %v1698
    %v1788 = vunpack.c.l.b16 %v1699
    %v1789 = vunpack.c.h.b16 %v1699
    %v1790 = vunpack.c.l.b16 %v1700
    %v1791 = vunpack.c.h.b16 %v1700
    %v1792 = vunpack.c.l.b16 %v1701
    %v1793 = vunpack.c.h.b16 %v1701
    %v1794 = vunpack.c.l.b16 %v1702
    %v1795 = vunpack.c.h.b16 %v1702
    %v1796 = vunpack.c.l.b16 %v1703
    %v1797 = vunpack.c.h.b16 %v1703
    %v1798 = vunpack.c.l.b16 %v1704
    %v1799 = vunpack.c.h.b16 %v1704
    %v1800 = vunpack.c.l.b16 %v1705
    %v1801 = vunpack.c.h.b16 %v1705
    %v1802 = vpack.c.b16 %v1738, %v1738
    %v1803 = vpack.c.b16 %v1739, %v1739
    %v1804 = vpack.c.b16 %v1740, %v1740
    %v1805 = vpack.c.b16 %v1741, %v1741
    %v1806 = vpack.c.b16 %v1742, %v1742
    %v1807 = vpack.c.b16 %v1743, %v1743
    %v1808 = vpack.c.b16 %v1744, %v1744
    %v1809 = vpack.c.b16 %v1745, %v1745
    %v1810 = vpack.c.b16 %v1746, %v1746
    %v1811 = vpack.c.b16 %v1747, %v1747
    %v1812 = vpack.c.b16 %v1748, %v1748
    %v1813 = vpack.c.b16 %v1749, %v1749
    %v1814 = vpack.c.b16 %v1750, %v1750
    %v1815 = vpack.c.b16 %v1751, %v1751
    %v1816 = vpack.c.b16 %v1752, %v1752
    %v1817 = vpack.c.b16 %v1753, %v1753
    %v1818 = vpack.c.b16 %v1754, %v1754
    %v1819 = vpack.c.b16 %v1755, %v1755
    %v1820 = vpack.c.b16 %v1756, %v1756
    %v1821 = vpack.c.b16 %v1757, %v1757
    %v1822 = vpack.c.b16 %v1758, %v1758
    %v1823 = vpack.c.b16 %v1759, %v1759
    %v1824 = vpack.c.b16 %v1760, %v1760
    %v1825 = vpack.c.b16 %v1761, %v1761
    %v1826 = vpack.c.b16 %v1762, %v1762
    %v1827 = vpack.c.b16 %v1763, %v1763
    %v1828 = vpack.c.b16 %v1764, %v1764
    %v1829 = vpack.c.b16 %v1765, %v1765
    %v1830 = vpack.c.b16 %v1766, %v1766
    %v1831 = vpack.c.b16 %v1767, %v1767
    %v1832 = vpack.c.b16 %v1768, %v1768
    %v1833 = vpack.c.b16 %v1769, %v1769
    %v1834 = vpack.c.b16 %v1770, %v1770
    %v1835 = vpack.c.b16 %v1771, %v1771
    %v1836 = vpack.c.b16 %v1772, %v1772
    %v1837 = vpack.c.b16 %v1773, %v1773
    %v1838 = vpack.c.b16 %v1774, %v1774
    %v1839 = vpack.c.b16 %v1775, %v1775
    %v1840 = vpack.c.b16 %v1776, %v1776
    %v1841 = vpack.c.b16 %v1777, %v1777
    %v1842 = vpack.c.b16 %v1778, %v1778
    %v1843 = vpack.c.b16 %v1779, %v1779
    %v1844 = vpack.c.b16 %v1780, %v1780
    %v1845 = vpack.c.b16 %v1781, %v1781
    %v1846 = vpack.c.b16 %v1782, %v1782
    %v1847 = vpack.c.b16 %v1783, %v1783
    %v1848 = vpack.c.b16 %v1784, %v1784
    %v1849 = vpack.c.b16 %v1785, %v1785
    %v1850 = vpack.c.b16 %v1786, %v1786
    %v1851 = vpack.c.b16 %v1787, %v1787
    %v1852 = vpack.c.b16 %v1788, %v1788
    %v1853 = vpack.c.b16 %v1789, %v1789
    %v1854 = vpack.c.b16 %v1790, %v1790
    %v1855 = vpack.c.b16 %v1791, %v1791
    %v1856 = vpack.c.b16 %v1792, %v1792
    %v1857 = vpack.c.b16 %v1793, %v1793
    %v1858 = vpack.c.b16 %v1794, %v1794
    %v1859 = vpack.c.b16 %v1795, %v1795
    %v1860 = vpack.c.b16 %v1796, %v1796
    %v1861 = vpack.c.b16 %v1797, %v1797
    %v1862 = vpack.c.b16 %v1798, %v1798
    %v1863 = vpack.c.b16 %v1799, %v1799
    %v1864 = vpack.c.b16 %v1800, %v1800
    %v1865 = vpack.c.b16 %v1801, %v1801
    %1930 = vst [vmem:[#allocation6] sm:$0xf] %v1802
    %1931 = vst [vmem:[#allocation6 + $0x4] sm:$0xf] %v1803
    %1932 = vst [vmem:[#allocation6 + $0x8] sm:$0xf] %v1804
    %1933 = vst [vmem:[#allocation6 + $0xc] sm:$0xf] %v1805
    %1934 = vst [vmem:[#allocation6 + $0x10] sm:$0xf] %v1806
    %1935 = vst [vmem:[#allocation6 + $0x14] sm:$0xf] %v1807
    %1936 = vst [vmem:[#allocation6 + $0x18] sm:$0xf] %v1808
    %1937 = vst [vmem:[#allocation6 + $0x1c] sm:$0xf] %v1809
    %1938 = vst [vmem:[#allocation6 + $0x20] sm:$0xf] %v1810
    %1939 = vst [vmem:[#allocation6 + $0x24] sm:$0xf] %v1811
    %1940 = vst [vmem:[#allocation6 + $0x28] sm:$0xf] %v1812
    %1941 = vst [vmem:[#allocation6 + $0x2c] sm:$0xf] %v1813
    %1942 = vst [vmem:[#allocation6 + $0x30] sm:$0xf] %v1814
    %1943 = vst [vmem:[#allocation6 + $0x34] sm:$0xf] %v1815
    %1944 = vst [vmem:[#allocation6 + $0x38] sm:$0xf] %v1816
    %1945 = vst [vmem:[#allocation6 + $0x3c] sm:$0xf] %v1817
    %1946 = vst [vmem:[#allocation6 + $0x40] sm:$0xf] %v1818
    %1947 = vst [vmem:[#allocation6 + $0x44] sm:$0xf] %v1819
    %1948 = vst [vmem:[#allocation6 + $0x48] sm:$0xf] %v1820
    %1949 = vst [vmem:[#allocation6 + $0x4c] sm:$0xf] %v1821
    %1950 = vst [vmem:[#allocation6 + $0x50] sm:$0xf] %v1822
    %1951 = vst [vmem:[#allocation6 + $0x54] sm:$0xf] %v1823
    %1952 = vst [vmem:[#allocation6 + $0x58] sm:$0xf] %v1824
    %1953 = vst [vmem:[#allocation6 + $0x5c] sm:$0xf] %v1825
    %1954 = vst [vmem:[#allocation6 + $0x60] sm:$0xf] %v1826
    %1955 = vst [vmem:[#allocation6 + $0x64] sm:$0xf] %v1827
    %1956 = vst [vmem:[#allocation6 + $0x68] sm:$0xf] %v1828
    %1957 = vst [vmem:[#allocation6 + $0x6c] sm:$0xf] %v1829
    %1958 = vst [vmem:[#allocation6 + $0x70] sm:$0xf] %v1830
    %1959 = vst [vmem:[#allocation6 + $0x74] sm:$0xf] %v1831
    %1960 = vst [vmem:[#allocation6 + $0x78] sm:$0xf] %v1832
    %1961 = vst [vmem:[#allocation6 + $0x7c] sm:$0xf] %v1833
    %1962 = vst [vmem:[#allocation6 + $0x80] sm:$0xf] %v1834
    %1963 = vst [vmem:[#allocation6 + $0x84] sm:$0xf] %v1835
    %1964 = vst [vmem:[#allocation6 + $0x88] sm:$0xf] %v1836
    %1965 = vst [vmem:[#allocation6 + $0x8c] sm:$0xf] %v1837
    %1966 = vst [vmem:[#allocation6 + $0x90] sm:$0xf] %v1838
    %1967 = vst [vmem:[#allocation6 + $0x94] sm:$0xf] %v1839
    %1968 = vst [vmem:[#allocation6 + $0x98] sm:$0xf] %v1840
    %1969 = vst [vmem:[#allocation6 + $0x9c] sm:$0xf] %v1841
    %1970 = vst [vmem:[#allocation6 + $0xa0] sm:$0xf] %v1842
    %1971 = vst [vmem:[#allocation6 + $0xa4] sm:$0xf] %v1843
    %1972 = vst [vmem:[#allocation6 + $0xa8] sm:$0xf] %v1844
    %1973 = vst [vmem:[#allocation6 + $0xac] sm:$0xf] %v1845
    %1974 = vst [vmem:[#allocation6 + $0xb0] sm:$0xf] %v1846
    %1975 = vst [vmem:[#allocation6 + $0xb4] sm:$0xf] %v1847
    %1976 = vst [vmem:[#allocation6 + $0xb8] sm:$0xf] %v1848
    %1977 = vst [vmem:[#allocation6 + $0xbc] sm:$0xf] %v1849
    %1978 = vst [vmem:[#allocation6 + $0xc0] sm:$0xf] %v1850
    %1979 = vst [vmem:[#allocation6 + $0xc4] sm:$0xf] %v1851
    %1980 = vst [vmem:[#allocation6 + $0xc8] sm:$0xf] %v1852
    %1981 = vst [vmem:[#allocation6 + $0xcc] sm:$0xf] %v1853
    %1982 = vst [vmem:[#allocation6 + $0xd0] sm:$0xf] %v1854
    %1983 = vst [vmem:[#allocation6 + $0xd4] sm:$0xf] %v1855
    %1984 = vst [vmem:[#allocation6 + $0xd8] sm:$0xf] %v1856
    %1985 = vst [vmem:[#allocation6 + $0xdc] sm:$0xf] %v1857
    %1986 = vst [vmem:[#allocation6 + $0xe0] sm:$0xf] %v1858
    %1987 = vst [vmem:[#allocation6 + $0xe4] sm:$0xf] %v1859
    %1988 = vst [vmem:[#allocation6 + $0xe8] sm:$0xf] %v1860
    %1989 = vst [vmem:[#allocation6 + $0xec] sm:$0xf] %v1861
    %1990 = vst [vmem:[#allocation6 + $0xf0] sm:$0xf] %v1862
    %1991 = vst [vmem:[#allocation6 + $0xf4] sm:$0xf] %v1863
    %1992 = vst [vmem:[#allocation6 + $0xf8] sm:$0xf] %v1864
    %1993 = vst [vmem:[#allocation6 + $0xfc] sm:$0xf] %v1865
    // Predicated region
    $region18: #{tpu_custom_call.1} parent=1 // pred_check
      _
    $region19: #{tpu_custom_call.1} parent=1 // pred_check_branch
      %1995 = sbr.rel (0) target = $region21
    $region20: #{tpu_custom_call.1} parent=1 // pred_region
      %s1997 = ssub.s32 4096, 4096
      %1998 = vsyncadd [#allocation4], %s1997
      %s1999 = sshll.u32 [#allocation5], 4
      %s2000 = int_to_ptr.vmem [resolvable:$true] %s1999
      %2005 = dma.vmem_to_hbm [thread:$0]  %s2000, 4096, %s3, [#allocation4], 64, 64, 4
    $region21: #{tpu_custom_call.1} parent=1 // pred_fallthru
      _
    // Predicated region
    $region22: #{tpu_custom_call.1} parent=1 // pred_check
      _
    $region23: #{tpu_custom_call.1} parent=1 // pred_check_branch
      %2007 = sbr.rel (0) target = $region25
    $region24: #{tpu_custom_call.1} parent=1 // pred_region
      %s2009 = ssub.s32 4096, 4096
      %2010 = vsyncadd [#allocation7], %s2009
      %s2011 = sshll.u32 [#allocation6], 4
      %s2012 = int_to_ptr.vmem [resolvable:$true] %s2011
      %2017 = dma.vmem_to_hbm [thread:$0]  %s2012, 4096, %s4, [#allocation7], 64, 64, 4
    $region25: #{tpu_custom_call.1} parent=1 // pred_fallthru
      _
    // Predicated region
    $region26: #{tpu_custom_call.1} parent=1 // pred_check
      _
    $region27: #{tpu_custom_call.1} parent=1 // pred_check_branch
      %2019 = sbr.rel (0) target = $region29
    $region28: #{tpu_custom_call.1} parent=1 // pred_region
      _
    $region29: #{tpu_custom_call.1} parent=1 // pred_fallthru
      _
    // Predicated region
    $region30: #{tpu_custom_call.1} parent=1 // pred_check
      _
    $region31: #{tpu_custom_call.1} parent=1 // pred_check_branch
      %2021 = sbr.rel (0) target = $region33
    $region32: #{tpu_custom_call.1} parent=1 // pred_region
      %2022 = dma.done [#allocation4], 4096
    $region33: #{tpu_custom_call.1} parent=1 // pred_fallthru
      _
    // Predicated region
    $region34: #{tpu_custom_call.1} parent=1 // pred_check
      _
    $region35: #{tpu_custom_call.1} parent=1 // pred_check_branch
      %2024 = sbr.rel (0) target = $region37
    $region36: #{tpu_custom_call.1} parent=1 // pred_region
      %2025 = dma.done [#allocation7], 4096
    $region37: #{tpu_custom_call.1} parent=1 // pred_fallthru
      _
    // Predicated region
    $region38: #{tpu_custom_call.1} parent=1 // pred_check
      _
    $region39: #{tpu_custom_call.1} parent=1 // pred_check_branch
      %2027 = sbr.rel (0) target = $region41
    $region40: #{tpu_custom_call.1} parent=1 // pred_region
      _
    $region41: #{tpu_custom_call.1} parent=1 // pred_fallthru
      _
    %2028 = vsyncpa [#allocation3], 1
    %2029 = vsyncpa [#allocation4], 1
    %2030 = vsyncpa [#allocation7], 1

</llo_original>
